<compile_context>
chip_gen: v6e
topology: v6e:2x2x1
jax: 0.10.0
libtpu: 0.0.40
codegen_flags: <defaults>
</compile_context>

<pallas_src>
import functools

import jax
import jax.numpy as jnp
from jax.experimental import pallas as pl
from jax.experimental.pallas import tpu as pltpu


def _round_up(x, m):
    return (x + m - 1) // m * m


# ----------------------------------------------------------------------------
# Pallas kernel: fused 1x1-conv MLP (BN folded) + ReLU, spatial attention gate,
# and channel-attention pre-activation with a per-tile channel-max output.
# ----------------------------------------------------------------------------
def _gate_kernel(xi_ref, xp_ref, w1i_ref, w1p_ref, b1_ref,
                 wsc_ref, bs_ref, bc1_ref, wc2_ref, bc2_ref,
                 o_ref, tmax_ref, *, cred, tile_n, n_valid):
    xi = xi_ref[0]                                     # (Ci9p, TN)  bf16
    xp = xp_ref[0]                                     # (Cp,   TN)  bf16

    # fusion_mlp: Conv1d(k=1) with BatchNorm + conv bias folded in, then ReLU.
    f = (jnp.dot(w1i_ref[...], xi, preferred_element_type=jnp.float32)
         + jnp.dot(w1p_ref[...], xp, preferred_element_type=jnp.float32)
         + b1_ref[...])
    f = jnp.maximum(f, 0.0)                            # (Cp, TN) f32

    # One stacked matmul feeds both attention branches ([ws ; wc1] @ f).
    # cred is padded to a multiple of 8 so both halves are sublane-tile aligned.
    sc = jnp.dot(wsc_ref[...], f.astype(jnp.bfloat16),
                 preferred_element_type=jnp.float32)   # (2*cred, TN)

    # Spatial attention: conv -> max over channels -> sigmoid -> gate.
    # Padded ws rows carry a -inf bias and never win this max.
    s_gate = jax.nn.sigmoid(
        jnp.max(sc[:cred] + bs_ref[...], axis=0, keepdims=True))      # (1, TN)
    fg = s_gate * f
    o_ref[0] = fg.astype(o_ref.dtype)        # bf16 store: dominant HBM stream

    # Channel attention: conv_c1(s*f) == s * (wc1 @ f) since s is a per-point
    # scalar, so the stacked matmul on un-gated f is reused here.
    c1 = jnp.maximum(s_gate * sc[cred:] + bc1_ref[...], 0.0)          # (cred, TN)
    c2 = jnp.dot(wc2_ref[...], c1.astype(jnp.bfloat16),
                 preferred_element_type=jnp.float32) + bc2_ref[...]   # (Cp, TN)

    # Per-tile channel max; the cross-tile max + sigmoid gate live in a tiny
    # XLA epilogue so both grid axes stay fully parallel (megacore-friendly).
    # NOTE: kept in (Cp, 1) orientation -- a lane-dense (1, Cp) store needs an
    # in-kernel sublane->lane relayout and only pays off once Cp >= 128.
    tmax_ref[0, 0] = jnp.max(c2, axis=-1, keepdims=True)              # (Cp, 1)

    # Only the last N tile can contain zero-padded columns: mask them there.
    if n_valid % tile_n != 0:                          # static
        @pl.when(pl.program_id(0) == pl.num_programs(0) - 1)
        def _():
            col = (pl.program_id(0) * tile_n
                   + jax.lax.broadcasted_iota(jnp.int32, c2.shape, 1))
            c2m = jnp.where(col < n_valid, c2, -jnp.inf)
            tmax_ref[0, 0] = jnp.max(c2m, axis=-1, keepdims=True)


def _prep_params(params, ci9, ci9_pad, wdtype=jnp.bfloat16):
    # Fold BatchNorm1d (eval mode) and the conv bias into one affine.
    w1 = params["w1"] * params["bn_scale"]
    b1 = params["b1"] * params["bn_scale"] + params["bn_shift"]
    w1_img, w1_pts = w1[:, :ci9], w1[:, ci9:]
    if ci9_pad > ci9:
        w1_img = jnp.pad(w1_img, ((0, 0), (0, ci9_pad - ci9)))

    # Pad cred to a multiple of 8 so the in-kernel sc[:cred]/sc[cred:] slices
    # are f32 (8,128) sublane-tile aligned (no relayout copies per tile).
    cred = params["ws"].shape[0]
    cred_pad = _round_up(cred, 8)
    pad_r = cred_pad - cred
    ws = jnp.pad(params["ws"], ((0, pad_r), (0, 0)))
    bs = jnp.pad(params["bs"], ((0, pad_r), (0, 0)),
                 constant_values=-jnp.inf)       # padded rows never win the max
    wc1 = jnp.pad(params["wc1"], ((0, pad_r), (0, 0)))
    bc1 = jnp.pad(params["bc1"], ((0, pad_r), (0, 0)))
    wc2 = jnp.pad(params["wc2"], ((0, 0), (0, pad_r)))
    wsc = jnp.concatenate([ws, wc1], axis=0)

    p = dict(
        w1_img=w1_img.astype(wdtype), w1_pts=w1_pts.astype(wdtype),
        b1=b1.astype(jnp.float32),
        wsc=wsc.astype(wdtype), bs=bs.astype(jnp.float32),
        bc1=bc1.astype(jnp.float32),
        wc2=wc2.astype(wdtype),
        bc2=params["bc2"].astype(jnp.float32))
    return cred_pad, p


def pointwise_gate5_pallas(pw_img, pts_feats, params, *, tile_n=2048,
                           apply_gate=True):
    """pw_img: (B, Ci*9, N) sampled image feats; pts_feats: (B, Cp, N).

    Returns bf16 gated features (B, Cp, N), or (features, gate) if
    apply_gate=False so a downstream consumer can fold the per-(B, Cp) scale
    into its own op and skip the extra read+write of the feature tensor.
    """
    B, ci9, N = pw_img.shape
    Cp = pts_feats.shape[1]

    ci9_pad = _round_up(ci9, 16)                         # bf16 sublane packing
    # HBM-bound: biggest lane-dense tile that fits; sweep 1024-4096 per chip.
    tile_n = max(128, _round_up(min(tile_n, _round_up(N, 128)), 128))
    n_pad = _round_up(N, tile_n)
    n_tiles = n_pad // tile_n

    cred_pad, p = _prep_params(params, ci9, ci9_pad)

    xi = pw_img.astype(jnp.bfloat16)
    xp = pts_feats.astype(jnp.bfloat16)
    if ci9_pad > ci9 or n_pad > N:
        xi = jnp.pad(xi, ((0, 0), (0, ci9_pad - ci9), (0, n_pad - N)))
    if n_pad > N:
        xp = jnp.pad(xp, ((0, 0), (0, 0), (0, n_pad - N)))

    kernel = functools.partial(_gate_kernel, cred=cred_pad, tile_n=tile_n,
                               n_valid=N)
    full2d = lambda shape: pl.BlockSpec(shape, lambda n, b: (0, 0))

    # Grid is (n_tiles, B): the high-trip-count axis comes first so a v7x
    # megacore split lands on it even when B == 1.  Both axes are parallel.
    out1, tmax = pl.pallas_call(
        kernel,
        out_shape=(jax.ShapeDtypeStruct((B, Cp, n_pad), jnp.bfloat16),
                   jax.ShapeDtypeStruct((B, n_tiles, Cp, 1), jnp.float32)),
        grid=(n_tiles, B),
        in_specs=[
            # pipeline_mode=pl.Buffered(3) only if a trace shows exposed DMA.
            pl.BlockSpec((1, ci9_pad, tile_n), lambda n, b: (b, 0, n)),
            pl.BlockSpec((1, Cp, tile_n), lambda n, b: (b, 0, n)),
            full2d(p["w1_img"].shape), full2d(p["w1_pts"].shape),
            full2d(p["b1"].shape), full2d(p["wsc"].shape),
            full2d(p["bs"].shape), full2d(p["bc1"].shape),
            full2d(p["wc2"].shape), full2d(p["bc2"].shape),
        ],
        out_specs=(pl.BlockSpec((1, Cp, tile_n), lambda n, b: (b, 0, n)),
                   pl.BlockSpec((1, 1, Cp, 1), lambda n, b: (b, n, 0, 0))),
        # No vmem_limit_bytes: blocks are <2 MB, the default scoped limit is
        # ample, and 64 MiB would be the entire physical VMEM on v7x.
        compiler_params=pltpu.CompilerParams(
            dimension_semantics=("parallel", "parallel")),
    )(xi, xp, p["w1_img"], p["w1_pts"], p["b1"],
      p["wsc"], p["bs"], p["bc1"], p["wc2"], p["bc2"])

    # Tiny epilogue: cross-tile channel max -> sigmoid gate (per (B, Cp)).
    gate = jax.nn.sigmoid(jnp.max(tmax, axis=1))          # (B, Cp, 1) f32
    out1 = out1[:, :, :N] if n_pad > N else out1   # keep slice next to kernel
    if not apply_gate:
        return out1, gate                       # downstream consumer folds gate
    # Single fused slice+scale pass, all in bf16.
    return out1 * gate.astype(out1.dtype)


# ----------------------------------------------------------------------------
# XLA glue: grid_sample(mode='bilinear', padding_mode='zeros',
# align_corners=False) equivalent.  Small total size -> one-hot MXU matmul
# (built in bf16); otherwise a gather fallback.
# ----------------------------------------------------------------------------
def _bilinear_corners(grid, H, W):
    gx, gy = grid[..., 0], grid[..., 1]
    ix = ((gx + 1.0) * W - 1.0) * 0.5          # align_corners=False
    iy = ((gy + 1.0) * H - 1.0) * 0.5
    ix0, iy0 = jnp.floor(ix), jnp.floor(iy)
    wx1, wy1 = ix - ix0, iy - iy0
    wx0, wy0 = 1.0 - wx1, 1.0 - wy1
    out = []
    for cx, cy, w in ((ix0, iy0, wx0 * wy0), (ix0 + 1, iy0, wx1 * wy0),
                      (ix0, iy0 + 1, wx0 * wy1), (ix0 + 1, iy0 + 1, wx1 * wy1)):
        valid = (cx >= 0) & (cx <= W - 1) & (cy >= 0) & (cy <= H - 1)
        xi = jnp.clip(cx, 0, W - 1).astype(jnp.int32)
        yi = jnp.clip(cy, 0, H - 1).astype(jnp.int32)
        out.append((yi * W + xi, w * valid.astype(grid.dtype)))
    return out


def sample_image_features(img, grid, *, onehot_bytes_limit=32 * 1024 * 1024):
    # img: (B, C, H, W); grid: (B, K, N, 2) in [-1, 1] -> (B, C*K, N)
    B, C, H, W = img.shape
    _, K, N, _ = grid.shape
    img_flat = img.reshape(B, C, H * W)
    corners = _bilinear_corners(grid, H, W)
    onehot_bytes = B * K * N * H * W * 2                 # bf16 one-hot tensor
    if onehot_bytes <= onehot_bytes_limit:
        # TPU-friendly: express the 4-corner bilinear gather as one matmul.
        S = jnp.zeros((B, K, N, H * W), jnp.bfloat16)
        for idx, w in corners:
            S = S + (jax.nn.one_hot(idx, H * W, dtype=jnp.bfloat16)
                     * w[..., None].astype(jnp.bfloat16))
        pw = jnp.einsum('bcq,bknq->bckn', img_flat.astype(jnp.bfloat16), S,
                        preferred_element_type=jnp.float32)   # (B, C, K, N)
    else:
        # TODO(synk): fuse this gather into the Pallas kernel (scalar-prefetched
        # corner indices + (Ci, H*W) image slab in VMEM) for large feature maps.
        pw = 0.0
        for idx, w in corners:
            gidx = jnp.broadcast_to(idx.reshape(B, 1, K * N), (B, C, K * N))
            g = jnp.take_along_axis(img_flat, gidx, axis=2).reshape(B, C, K, N)
            pw = pw + g * w[:, None, :, :]
    return pw.reshape(B, C * K, N)


def make_offset():
    vals = jnp.array([-1.0, 0.0, 1.0], dtype=jnp.float32)
    ox, oy = jnp.meshgrid(vals, vals, indexing="ij")
    return jnp.stack([ox.reshape(-1), oy.reshape(-1)], axis=1).reshape(1, 9, 1, 2)


def pointwise_gate5_forward(pts_img, img_feats, pts_feats, params, *,
                            tile_n=2048):
    """pts_img: (B,N,2)  img_feats: (B,Ci,H,W)  pts_feats: (B,Cp,N) -> (B,Cp,N)."""
    B, Ci, H, W = img_feats.shape
    delta = jnp.array([2.0 / W, 2.0 / H], jnp.float32).reshape(1, 1, 1, 2)
    pts_grid = pts_img[:, None, :, :] + make_offset() * delta      # (B,9,N,2)
    pw_img = sample_image_features(img_feats, pts_grid)            # (B,Ci*9,N)
    return pointwise_gate5_pallas(pw_img, pts_feats, params, tile_n=tile_n)


# ----------------------------------------------------------------------------
# Pure-JAX f32 reference (original op ordering, unfolded BN) for validation.
# ----------------------------------------------------------------------------
def reference_forward(pts_img, img_feats, pts_feats, p):
    B, Ci, H, W = img_feats.shape
    delta = jnp.array([2.0 / W, 2.0 / H], jnp.float32).reshape(1, 1, 1, 2)
    grid = pts_img[:, None, :, :] + make_offset() * delta
    pw_img = sample_image_features(img_feats, grid)
    x = jnp.concatenate([pw_img, pts_feats], axis=1)
    f = jnp.einsum('oc,bcn->bon', p["w1"], x) + p["b1"]
    f = jnp.maximum(f * p["bn_scale"] + p["bn_shift"], 0.0)
    s = jnp.einsum('oc,bcn->bon', p["ws"], f) + p["bs"]
    f = jax.nn.sigmoid(jnp.max(s, axis=1, keepdims=True)) * f
    c = jnp.maximum(jnp.einsum('oc,bcn->bon', p["wc1"], f) + p["bc1"], 0.0)
    c = jnp.einsum('oc,bcn->bon', p["wc2"], c) + p["bc2"]
    return jax.nn.sigmoid(jnp.max(c, axis=-1, keepdims=True)) * f


def init_params(key, img_channels, pts_channels, reduction):
    cin = img_channels * 9 + pts_channels
    cred = pts_channels // reduction
    ks = jax.random.split(key, 10)
    n = lambda k, s, sc=0.1: (sc * jax.random.normal(k, s)).astype(jnp.float32)

    gamma = 1.0 + 0.05 * jax.random.normal(ks[7], (pts_channels, 1))
    beta = 0.05 * jax.random.normal(ks[8], (pts_channels, 1))
    run_mean = 0.05 * jax.random.normal(ks[9], (pts_channels, 1))
    run_var = jnp.ones((pts_channels, 1), jnp.float32)
    bn_scale = (gamma / jnp.sqrt(run_var + 1e-5)).astype(jnp.float32)
    bn_shift = (beta - run_mean * bn_scale).astype(jnp.float32)

    return {
        "w1": n(ks[0], (pts_channels, cin)), "b1": n(ks[1], (pts_channels, 1)),
        "bn_scale": bn_scale, "bn_shift": bn_shift,
        "ws": n(ks[2], (cred, pts_channels)), "bs": n(ks[3], (cred, 1)),
        "wc1": n(ks[4], (cred, pts_channels)), "bc1": n(ks[5], (cred, 1)),
        "wc2": n(ks[6], (pts_channels, cred)),
        "bc2": jnp.zeros((pts_channels, 1), jnp.float32),
    }


if __name__ == "__main__":
    B, Ci, Cp, H, W, N, reduction = 2, 4, 32, 8, 8, 512, 4

    key = jax.random.PRNGKey(0)
    k_pimg, k_img, k_pts, k_par = jax.random.split(key, 4)
    pts_img = jax.random.uniform(k_pimg, (B, N, 2), jnp.float32, -0.9, 0.9)
    img_feats = jax.random.normal(k_img, (B, Ci, H, W), jnp.float32)
    pts_feats = jax.random.normal(k_pts, (B, Cp, N), jnp.float32)
    params = init_params(k_par, Ci, Cp, reduction)

    # Default tile_n=2048 clamps to N=512 for this small demo (one tile/batch).
    fwd = jax.jit(pointwise_gate5_forward)
    out = jax.block_until_ready(fwd(pts_img, img_feats, pts_feats, params))
    assert out.shape == (B, Cp, N), out.shape

    ref = jax.jit(reference_forward)(pts_img, img_feats, pts_feats, params)
    err = float(jnp.max(jnp.abs(out.astype(jnp.float32) - ref)))
    assert bool(jnp.all(jnp.isfinite(out))) and err < 1e-1, err
    print("KERNEL_OK")
</pallas_src>

<mosaic_0001>
module attributes {stable_mosaic.version = 11 : i64} {
  func.func @_gate_kernel(%arg0: i32, %arg1: i32, %arg2: memref<1x48x512xbf16, #tpu.memory_space<vmem>>, %arg3: memref<1x32x512xbf16, #tpu.memory_space<vmem>>, %arg4: memref<32x48xbf16, #tpu.memory_space<vmem>>, %arg5: memref<32x32xbf16, #tpu.memory_space<vmem>>, %arg6: memref<32x1xf32, #tpu.memory_space<vmem>>, %arg7: memref<16x32xbf16, #tpu.memory_space<vmem>>, %arg8: memref<8x1xf32, #tpu.memory_space<vmem>>, %arg9: memref<8x1xf32, #tpu.memory_space<vmem>>, %arg10: memref<32x8xbf16, #tpu.memory_space<vmem>>, %arg11: memref<32x1xf32, #tpu.memory_space<vmem>>, %arg12: memref<1x32x512xbf16, #tpu.memory_space<vmem>>, %arg13: memref<1x1x32x1xf32, #tpu.memory_space<vmem>>) attributes {dimension_semantics = [#tpu.dimension_semantics<parallel>, #tpu.dimension_semantics<parallel>], iteration_bounds = array<i64: 1, 2>, scalar_prefetch = 0 : i64, scratch_operands = 0 : i64, tpu.core_type = #tpu.core_type<tc>, window_params = [{transform_indices = @transform_0, window_bounds = array<i64: 1, 48, 512>}, {transform_indices = @transform_1, window_bounds = array<i64: 1, 32, 512>}, {pipeline_mode = #tpu.pipeline_mode<synchronous>, transform_indices = @transform_2, window_bounds = array<i64: 32, 48>}, {pipeline_mode = #tpu.pipeline_mode<synchronous>, transform_indices = @transform_3, window_bounds = array<i64: 32, 32>}, {pipeline_mode = #tpu.pipeline_mode<synchronous>, transform_indices = @transform_4, window_bounds = array<i64: 32, 1>}, {pipeline_mode = #tpu.pipeline_mode<synchronous>, transform_indices = @transform_5, window_bounds = array<i64: 16, 32>}, {pipeline_mode = #tpu.pipeline_mode<synchronous>, transform_indices = @transform_6, window_bounds = array<i64: 8, 1>}, {pipeline_mode = #tpu.pipeline_mode<synchronous>, transform_indices = @transform_7, window_bounds = array<i64: 8, 1>}, {pipeline_mode = #tpu.pipeline_mode<synchronous>, transform_indices = @transform_8, window_bounds = array<i64: 32, 8>}, {pipeline_mode = #tpu.pipeline_mode<synchronous>, transform_indices = @transform_9, window_bounds = array<i64: 32, 1>}, {transform_indices = @transform_10, window_bounds = array<i64: 1, 32, 512>}, {transform_indices = @transform_11, window_bounds = array<i64: 1, 1, 32, 1>}]} {
    %c0 = arith.constant 0 : index
    %c0_0 = arith.constant 0 : index
    %c0_1 = arith.constant 0 : index
    %0 = vector.load %arg2[%c0, %c0_0, %c0_1] : memref<1x48x512xbf16, #tpu.memory_space<vmem>>, vector<1x48x512xbf16>
    %1 = vector.shape_cast %0 : vector<1x48x512xbf16> to vector<48x512xbf16>
    %c0_2 = arith.constant 0 : index
    %c0_3 = arith.constant 0 : index
    %c0_4 = arith.constant 0 : index
    %2 = vector.load %arg3[%c0_2, %c0_3, %c0_4] : memref<1x32x512xbf16, #tpu.memory_space<vmem>>, vector<1x32x512xbf16>
    %3 = vector.shape_cast %2 : vector<1x32x512xbf16> to vector<32x512xbf16>
    %c0_5 = arith.constant 0 : index
    %c0_6 = arith.constant 0 : index
    %4 = vector.load %arg4[%c0_5, %c0_6] : memref<32x48xbf16, #tpu.memory_space<vmem>>, vector<32x48xbf16>
    %cst = arith.constant dense<0.000000e+00> : vector<32x512xf32>
    %5 = tpu.matmul %4, %1, %cst {dimension_numbers = #tpu.dot_dimension_numbers<[1], [0], [0], [1], [0, 0, 1, 1], [], []>} : vector<32x48xbf16>, vector<48x512xbf16>, vector<32x512xf32> -> vector<32x512xf32>
    %c0_7 = arith.constant 0 : index
    %c0_8 = arith.constant 0 : index
    %6 = vector.load %arg5[%c0_7, %c0_8] : memref<32x32xbf16, #tpu.memory_space<vmem>>, vector<32x32xbf16>
    %cst_9 = arith.constant dense<0.000000e+00> : vector<32x512xf32>
    %7 = tpu.matmul %6, %3, %cst_9 {dimension_numbers = #tpu.dot_dimension_numbers<[1], [0], [0], [1], [0, 0, 1, 1], [], []>} : vector<32x32xbf16>, vector<32x512xbf16>, vector<32x512xf32> -> vector<32x512xf32>
    %8 = arith.addf %5, %7 : vector<32x512xf32>
    %c0_10 = arith.constant 0 : index
    %c0_11 = arith.constant 0 : index
    %9 = vector.load %arg6[%c0_10, %c0_11] : memref<32x1xf32, #tpu.memory_space<vmem>>, vector<32x1xf32>
    %10 = vector.broadcast %9 : vector<32x1xf32> to vector<32x512xf32>
    %11 = arith.addf %8, %10 : vector<32x512xf32>
    %cst_12 = arith.constant 0.000000e+00 : f32
    %12 = vector.broadcast %cst_12 : f32 to vector<32x512xf32>
    %13 = arith.maximumf %11, %12 : vector<32x512xf32>
    %c0_13 = arith.constant 0 : index
    %c0_14 = arith.constant 0 : index
    %14 = vector.load %arg7[%c0_13, %c0_14] : memref<16x32xbf16, #tpu.memory_space<vmem>>, vector<16x32xbf16>
    %15 = arith.truncf %13 : vector<32x512xf32> to vector<32x512xbf16>
    %cst_15 = arith.constant dense<0.000000e+00> : vector<16x512xf32>
    %16 = tpu.matmul %14, %15, %cst_15 {dimension_numbers = #tpu.dot_dimension_numbers<[1], [0], [0], [1], [0, 0, 1, 1], [], []>} : vector<16x32xbf16>, vector<32x512xbf16>, vector<16x512xf32> -> vector<16x512xf32>
    %17 = vector.extract_strided_slice %16 {offsets = [0, 0], sizes = [8, 512], strides = [1, 1]} : vector<16x512xf32> to vector<8x512xf32>
    %c0_16 = arith.constant 0 : index
    %c0_17 = arith.constant 0 : index
    %18 = vector.load %arg8[%c0_16, %c0_17] : memref<8x1xf32, #tpu.memory_space<vmem>>, vector<8x1xf32>
    %19 = vector.broadcast %18 : vector<8x1xf32> to vector<8x512xf32>
    %20 = arith.addf %17, %19 : vector<8x512xf32>
    %cst_18 = arith.constant dense<0xFF800000> : vector<512xf32>
    %21 = vector.multi_reduction <maximumf>, %20, %cst_18 [0] : vector<8x512xf32> to vector<512xf32>
    %22 = vector.shape_cast %21 : vector<512xf32> to vector<1x512xf32>
    %23 = arith.negf %22 : vector<1x512xf32>
    %24 = math.exp %23 : vector<1x512xf32>
    %cst_19 = arith.constant 1.000000e+00 : f32
    %25 = vector.broadcast %cst_19 : f32 to vector<1x512xf32>
    %26 = arith.addf %25, %24 : vector<1x512xf32>
    %27 = arith.divf %25, %26 : vector<1x512xf32>
    %28 = vector.broadcast %27 : vector<1x512xf32> to vector<32x512xf32>
    %29 = arith.mulf %28, %13 : vector<32x512xf32>
    %30 = arith.truncf %29 : vector<32x512xf32> to vector<32x512xbf16>
    %c0_20 = arith.constant 0 : index
    %c0_21 = arith.constant 0 : index
    %c0_22 = arith.constant 0 : index
    %31 = vector.load %arg12[%c0_20, %c0_21, %c0_22] : memref<1x32x512xbf16, #tpu.memory_space<vmem>>, vector<1x32x512xbf16>
    %32 = vector.shape_cast %31 : vector<1x32x512xbf16> to vector<32x512xbf16>
    %33 = vector.shape_cast %30 : vector<32x512xbf16> to vector<1x32x512xbf16>
    tpu.vector_store %arg12[%c0_20, %c0_21, %c0_22], %33 {strides = array<i32>} : memref<1x32x512xbf16, #tpu.memory_space<vmem>>, vector<1x32x512xbf16>,
    %34 = vector.extract_strided_slice %16 {offsets = [8, 0], sizes = [8, 512], strides = [1, 1]} : vector<16x512xf32> to vector<8x512xf32>
    %35 = vector.broadcast %27 : vector<1x512xf32> to vector<8x512xf32>
    %36 = arith.mulf %35, %34 : vector<8x512xf32>
    %c0_23 = arith.constant 0 : index
    %c0_24 = arith.constant 0 : index
    %37 = vector.load %arg9[%c0_23, %c0_24] : memref<8x1xf32, #tpu.memory_space<vmem>>, vector<8x1xf32>
    %38 = vector.broadcast %37 : vector<8x1xf32> to vector<8x512xf32>
    %39 = arith.addf %36, %38 : vector<8x512xf32>
    %cst_25 = arith.constant 0.000000e+00 : f32
    %40 = vector.broadcast %cst_25 : f32 to vector<8x512xf32>
    %41 = arith.maximumf %39, %40 : vector<8x512xf32>
    %c0_26 = arith.constant 0 : index
    %c0_27 = arith.constant 0 : index
    %42 = vector.load %arg10[%c0_26, %c0_27] : memref<32x8xbf16, #tpu.memory_space<vmem>>, vector<32x8xbf16>
    %43 = arith.truncf %41 : vector<8x512xf32> to vector<8x512xbf16>
    %cst_28 = arith.constant dense<0.000000e+00> : vector<32x512xf32>
    %44 = tpu.matmul %42, %43, %cst_28 {dimension_numbers = #tpu.dot_dimension_numbers<[1], [0], [0], [1], [0, 0, 1, 1], [], []>} : vector<32x8xbf16>, vector<8x512xbf16>, vector<32x512xf32> -> vector<32x512xf32>
    %c0_29 = arith.constant 0 : index
    %c0_30 = arith.constant 0 : index
    %45 = vector.load %arg11[%c0_29, %c0_30] : memref<32x1xf32, #tpu.memory_space<vmem>>, vector<32x1xf32>
    %46 = vector.broadcast %45 : vector<32x1xf32> to vector<32x512xf32>
    %47 = arith.addf %44, %46 : vector<32x512xf32>
    %cst_31 = arith.constant dense<0xFF800000> : vector<32xf32>
    %48 = vector.multi_reduction <maximumf>, %47, %cst_31 [1] : vector<32x512xf32> to vector<32xf32>
    %49 = vector.shape_cast %48 : vector<32xf32> to vector<32x1xf32>
    %c0_32 = arith.constant 0 : index
    %c0_33 = arith.constant 0 : index
    %c0_34 = arith.constant 0 : index
    %c0_35 = arith.constant 0 : index
    %50 = vector.load %arg13[%c0_32, %c0_33, %c0_34, %c0_35] : memref<1x1x32x1xf32, #tpu.memory_space<vmem>>, vector<1x1x32x1xf32>
    %51 = vector.shape_cast %50 : vector<1x1x32x1xf32> to vector<32x1xf32>
    %52 = vector.shape_cast %49 : vector<32x1xf32> to vector<1x1x32x1xf32>
    tpu.vector_store %arg13[%c0_32, %c0_33, %c0_34, %c0_35], %52 {strides = array<i32>} : memref<1x1x32x1xf32, #tpu.memory_space<vmem>>, vector<1x1x32x1xf32>,
    return
  }
  func.func @transform_0(%arg0: i32, %arg1: i32) -> (i32, i32, i32) {
    %c0_i32 = arith.constant 0 : i32
    %c0_i32_0 = arith.constant 0 : i32
    return %arg1, %c0_i32, %arg0 : i32, i32, i32
  }
  func.func @transform_1(%arg0: i32, %arg1: i32) -> (i32, i32, i32) {
    %c0_i32 = arith.constant 0 : i32
    %c0_i32_0 = arith.constant 0 : i32
    return %arg1, %c0_i32, %arg0 : i32, i32, i32
  }
  func.func @transform_2(%arg0: i32, %arg1: i32) -> (i32, i32) {
    %c0_i32 = arith.constant 0 : i32
    %c0_i32_0 = arith.constant 0 : i32
    %c0_i32_1 = arith.constant 0 : i32
    return %c0_i32, %c0_i32_0 : i32, i32
  }
  func.func @transform_3(%arg0: i32, %arg1: i32) -> (i32, i32) {
    %c0_i32 = arith.constant 0 : i32
    %c0_i32_0 = arith.constant 0 : i32
    %c0_i32_1 = arith.constant 0 : i32
    return %c0_i32, %c0_i32_0 : i32, i32
  }
  func.func @transform_4(%arg0: i32, %arg1: i32) -> (i32, i32) {
    %c0_i32 = arith.constant 0 : i32
    %c0_i32_0 = arith.constant 0 : i32
    %c0_i32_1 = arith.constant 0 : i32
    return %c0_i32, %c0_i32_0 : i32, i32
  }
  func.func @transform_5(%arg0: i32, %arg1: i32) -> (i32, i32) {
    %c0_i32 = arith.constant 0 : i32
    %c0_i32_0 = arith.constant 0 : i32
    %c0_i32_1 = arith.constant 0 : i32
    return %c0_i32, %c0_i32_0 : i32, i32
  }
  func.func @transform_6(%arg0: i32, %arg1: i32) -> (i32, i32) {
    %c0_i32 = arith.constant 0 : i32
    %c0_i32_0 = arith.constant 0 : i32
    %c0_i32_1 = arith.constant 0 : i32
    return %c0_i32, %c0_i32_0 : i32, i32
  }
  func.func @transform_7(%arg0: i32, %arg1: i32) -> (i32, i32) {
    %c0_i32 = arith.constant 0 : i32
    %c0_i32_0 = arith.constant 0 : i32
    %c0_i32_1 = arith.constant 0 : i32
    return %c0_i32, %c0_i32_0 : i32, i32
  }
  func.func @transform_8(%arg0: i32, %arg1: i32) -> (i32, i32) {
    %c0_i32 = arith.constant 0 : i32
    %c0_i32_0 = arith.constant 0 : i32
    %c0_i32_1 = arith.constant 0 : i32
    return %c0_i32, %c0_i32_0 : i32, i32
  }
  func.func @transform_9(%arg0: i32, %arg1: i32) -> (i32, i32) {
    %c0_i32 = arith.constant 0 : i32
    %c0_i32_0 = arith.constant 0 : i32
    %c0_i32_1 = arith.constant 0 : i32
    return %c0_i32, %c0_i32_0 : i32, i32
  }
  func.func @transform_10(%arg0: i32, %arg1: i32) -> (i32, i32, i32) {
    %c0_i32 = arith.constant 0 : i32
    %c0_i32_0 = arith.constant 0 : i32
    return %arg1, %c0_i32, %arg0 : i32, i32, i32
  }
  func.func @transform_11(%arg0: i32, %arg1: i32) -> (i32, i32, i32, i32) {
    %c0_i32 = arith.constant 0 : i32
    %c0_i32_0 = arith.constant 0 : i32
    %c0_i32_1 = arith.constant 0 : i32
    return %arg1, %arg0, %c0_i32, %c0_i32_0 : i32, i32, i32, i32
  }
}

</mosaic_0001>

<llo_original>
// kernel: mul.79
$region0: #{mul.79}
  #allocation0 [shape = 's32[1]{0}', space=sflag, size = 0x4, scoped, tag = 'scoped memory for mul.79']
  %s0 = inlined_call_operand.vmem [shape: f32[32,1], index: 0, kind: input, shape index: {}]
  %s1 = inlined_call_operand.vmem [shape: f32[32,1], index: 1, kind: input, shape index: {}]
  %s2 = inlined_call_operand.vmem [shape: f32[32,1], index: 2, kind: output, shape index: {}]
  %v3 = vld [vmem:[%s0] sm:$0x1]
  %v4 = vld [vmem:[%s1] sm:$0x1]
  %5 = xla_tuple %v3, %v4
  %6 = xla_tuple %5
  %v7 = vmul.f32 %v3, %v4
  %8 = xla_tuple %v7
  %9 = vst [vmem:[%s2] sm:$0x1] %v7

// kernel: pointwise_gate5_forward.1
$region0: #{pointwise_gate5_forward.1}
  #allocation0 [shape = 'u32[]', space=smem, size = 0x4, offset = 0x4, fixed_abs, tag = 'smem constant byte address 0x4 - core index']
  #allocation1 [shape = 'u32[144,128]{1,0:T(1,128)}', space=vmem, size = 0x12000, scoped, tag = 'internal scratch']
  %s0 = inlined_call_operand.vmem [shape: bf16[2,48,512], index: 0, kind: input, shape index: {}]
  %s1 = inlined_call_operand.vmem [shape: bf16[2,32,512], index: 1, kind: input, shape index: {}]
  %s2 = inlined_call_operand.vmem [shape: bf16[32,48], index: 2, kind: input, shape index: {}]
  %s3 = inlined_call_operand.vmem [shape: bf16[32,32], index: 3, kind: input, shape index: {}]
  %s4 = inlined_call_operand.vmem [shape: f32[32,1], index: 4, kind: input, shape index: {}]
  %s5 = inlined_call_operand.vmem [shape: bf16[16,32], index: 5, kind: input, shape index: {}]
  %s6 = inlined_call_operand.vmem [shape: f32[8,1], index: 6, kind: input, shape index: {}]
  %s7 = inlined_call_operand.vmem [shape: f32[8,1], index: 7, kind: input, shape index: {}]
  %s8 = inlined_call_operand.vmem [shape: bf16[32,8], index: 8, kind: input, shape index: {}]
  %s9 = inlined_call_operand.vmem [shape: f32[32,1], index: 9, kind: input, shape index: {}]
  %s10 = inlined_call_operand.vmem [shape: bf16[2,32,512], index: 10, kind: output, shape index: {0}]
  %s11 = inlined_call_operand.vmem [shape: f32[2,1,32,1], index: 11, kind: output, shape index: {1}]
  %12 = xla_tuple %s10, %s11
  %s13 = sld [smem:[#allocation0]]
  $region81: #{pointwise_gate5_forward.1} parent=0
    _
  %s15 = ssub.s32 1, %s13
  %s16 = scalar_select 0, %s15, %s13
  loop: start=0, step=1, limit=4
  $region2: #{pointwise_gate5_forward.1} parent=0 // loop_pre_header
    _
  $region3: #{pointwise_gate5_forward.1} parent=0 // loop_header
    %s18 = sphi 0, %s22
    %p19 = scmp.ge.s32.totalorder %s18, 4
    %s25 = sphi 0, %s37
    %s26 = sphi 0, %s33
    %s27 = sphi 0, %s25
    %s28 = sphi 0, %s26
    %s29 = sphi 0, %s27
    %s30 = sphi 0, %s28
    %s42 = sphi 0, %s44
    %s45 = sphi 0, %s42
    %s46 = sphi 0, %s45
    %s62 = sphi 0, %s46
    %s70 = sphi 0, %s72
    %s73 = sphi 0, %s70
    %s74 = sphi 0, %s73
    %s90 = sphi 0, %s74
    %s94 = sphi 0, %s94
    %s96 = sphi 0, %s94
    %s97 = sphi 0, %s96
    %s111 = sphi 0, %s97
    %s115 = sphi 0, %s115
    %s117 = sphi 0, %s115
    %s118 = sphi 0, %s117
    %s132 = sphi 0, %s118
    %s136 = sphi 0, %s136
    %s138 = sphi 0, %s136
    %s139 = sphi 0, %s138
    %s153 = sphi 0, %s139
    %s157 = sphi 0, %s157
    %s159 = sphi 0, %s157
    %s160 = sphi 0, %s159
    %s174 = sphi 0, %s160
    %s178 = sphi 0, %s178
    %s180 = sphi 0, %s178
    %s181 = sphi 0, %s180
    %s195 = sphi 0, %s181
    %s199 = sphi 0, %s199
    %s201 = sphi 0, %s199
    %s202 = sphi 0, %s201
    %s216 = sphi 0, %s202
    %s220 = sphi 0, %s220
    %s222 = sphi 0, %s220
    %s223 = sphi 0, %s222
    %s237 = sphi 0, %s223
    %s241 = sphi 0, %s241
    %s243 = sphi 0, %s241
    %s244 = sphi 0, %s243
    %s258 = sphi 0, %s244
    %s266 = sphi 0, %s268
    %s269 = sphi 0, %s266
    %s270 = sphi 0, %s269
    %s286 = sphi 0, %s270
    %s294 = sphi 0, %s296
    %s297 = sphi 0, %s294
    %s298 = sphi 0, %s297
    %s314 = sphi 0, %s298
  $region4: #{pointwise_gate5_forward.1} parent=0 // loop_header_branch
    %21 = sbr.rel (%p19) target = $region8
  $region5: #{pointwise_gate5_forward.1} parent=0 // loop_body
    %s23 = ssub.s32 %s18, 1
    %s24 = ssub.s32 %s18, 2
    %s31 = sadd.s32 1, %s26
    %p32 = scmp.ge.s32.totalorder %s31, 2
    %s33 = scalar_select %p32, 0, %s31
    %s34 = sadd.s32 1, %s25
    %s35 = scalar_select %p32, %s34, %s25
    %p36 = scmp.ge.s32.totalorder %s35, 1
    %s37 = scalar_select %p36, 0, %s35
    %s38 = ssub.s32 %s26, %s33
    %s39 = ssub.s32 %s25, %s37
    %s40 = sor.u32 %s38, %s39
    %p41 = scmp.eq.s32.totalorder %s40, 0
    %s43 = sadd.s32 %s42, 1
    %s44 = scalar_select %p41, %s42, %s43
    %p47 = pneg %p41
    %p48 = scmp.eq.s32.totalorder %s18, 1
    %p49 = por %p47, %p48
    %p50 = scmp.ne.s32.totalorder %s42, %s45
    %p51 = scmp.eq.s32.totalorder %s18, 0
    %p52 = por %p50, %p51
    %p53 = scmp.ne.s32.totalorder %s42, %s45
    %p54 = scmp.eq.s32.totalorder %s23, 1
    %p55 = por %p53, %p54
    %p56 = scmp.ne.s32.totalorder %s45, %s46
    %p57 = scmp.eq.s32.totalorder %s23, 0
    %p58 = por %p56, %p57
    %p59 = scmp.ne.s32.totalorder %s45, %s46
    %p60 = scmp.eq.s32.totalorder %s24, 1
    %p61 = por %p59, %p60
    %p63 = scmp.ne.s32.totalorder %s46, %s62
    %p64 = scmp.eq.s32.totalorder %s24, 0
    %p65 = por %p63, %p64
    %s66 = ssub.s32 %s26, %s33
    %s67 = ssub.s32 %s25, %s37
    %s68 = sor.u32 %s66, %s67
    %p69 = scmp.eq.s32.totalorder %s68, 0
    %s71 = sadd.s32 %s70, 1
    %s72 = scalar_select %p69, %s70, %s71
    %p75 = pneg %p69
    %p76 = scmp.eq.s32.totalorder %s18, 1
    %p77 = por %p75, %p76
    %p78 = scmp.ne.s32.totalorder %s70, %s73
    %p79 = scmp.eq.s32.totalorder %s18, 0
    %p80 = por %p78, %p79
    %p81 = scmp.ne.s32.totalorder %s70, %s73
    %p82 = scmp.eq.s32.totalorder %s23, 1
    %p83 = por %p81, %p82
    %p84 = scmp.ne.s32.totalorder %s73, %s74
    %p85 = scmp.eq.s32.totalorder %s23, 0
    %p86 = por %p84, %p85
    %p87 = scmp.ne.s32.totalorder %s73, %s74
    %p88 = scmp.eq.s32.totalorder %s24, 1
    %p89 = por %p87, %p88
    %p91 = scmp.ne.s32.totalorder %s74, %s90
    %p92 = scmp.eq.s32.totalorder %s24, 0
    %p93 = por %p91, %p92
    %s95 = sadd.s32 %s94, 1
    %p98 = scmp.eq.s32.totalorder %s18, 1
    %p99 = scmp.ne.s32.totalorder %s94, %s96
    %p100 = scmp.eq.s32.totalorder %s18, 0
    %p101 = por %p99, %p100
    %p102 = scmp.ne.s32.totalorder %s94, %s96
    %p103 = scmp.eq.s32.totalorder %s23, 1
    %p104 = por %p102, %p103
    %p105 = scmp.ne.s32.totalorder %s96, %s97
    %p106 = scmp.eq.s32.totalorder %s23, 0
    %p107 = por %p105, %p106
    %p108 = scmp.ne.s32.totalorder %s96, %s97
    %p109 = scmp.eq.s32.totalorder %s24, 1
    %p110 = por %p108, %p109
    %p112 = scmp.ne.s32.totalorder %s97, %s111
    %p113 = scmp.eq.s32.totalorder %s24, 0
    %p114 = por %p112, %p113
    %s116 = sadd.s32 %s115, 1
    %p119 = scmp.eq.s32.totalorder %s18, 1
    %p120 = scmp.ne.s32.totalorder %s115, %s117
    %p121 = scmp.eq.s32.totalorder %s18, 0
    %p122 = por %p120, %p121
    %p123 = scmp.ne.s32.totalorder %s115, %s117
    %p124 = scmp.eq.s32.totalorder %s23, 1
    %p125 = por %p123, %p124
    %p126 = scmp.ne.s32.totalorder %s117, %s118
    %p127 = scmp.eq.s32.totalorder %s23, 0
    %p128 = por %p126, %p127
    %p129 = scmp.ne.s32.totalorder %s117, %s118
    %p130 = scmp.eq.s32.totalorder %s24, 1
    %p131 = por %p129, %p130
    %p133 = scmp.ne.s32.totalorder %s118, %s132
    %p134 = scmp.eq.s32.totalorder %s24, 0
    %p135 = por %p133, %p134
    %s137 = sadd.s32 %s136, 1
    %p140 = scmp.eq.s32.totalorder %s18, 1
    %p141 = scmp.ne.s32.totalorder %s136, %s138
    %p142 = scmp.eq.s32.totalorder %s18, 0
    %p143 = por %p141, %p142
    %p144 = scmp.ne.s32.totalorder %s136, %s138
    %p145 = scmp.eq.s32.totalorder %s23, 1
    %p146 = por %p144, %p145
    %p147 = scmp.ne.s32.totalorder %s138, %s139
    %p148 = scmp.eq.s32.totalorder %s23, 0
    %p149 = por %p147, %p148
    %p150 = scmp.ne.s32.totalorder %s138, %s139
    %p151 = scmp.eq.s32.totalorder %s24, 1
    %p152 = por %p150, %p151
    %p154 = scmp.ne.s32.totalorder %s139, %s153
    %p155 = scmp.eq.s32.totalorder %s24, 0
    %p156 = por %p154, %p155
    %s158 = sadd.s32 %s157, 1
    %p161 = scmp.eq.s32.totalorder %s18, 1
    %p162 = scmp.ne.s32.totalorder %s157, %s159
    %p163 = scmp.eq.s32.totalorder %s18, 0
    %p164 = por %p162, %p163
    %p165 = scmp.ne.s32.totalorder %s157, %s159
    %p166 = scmp.eq.s32.totalorder %s23, 1
    %p167 = por %p165, %p166
    %p168 = scmp.ne.s32.totalorder %s159, %s160
    %p169 = scmp.eq.s32.totalorder %s23, 0
    %p170 = por %p168, %p169
    %p171 = scmp.ne.s32.totalorder %s159, %s160
    %p172 = scmp.eq.s32.totalorder %s24, 1
    %p173 = por %p171, %p172
    %p175 = scmp.ne.s32.totalorder %s160, %s174
    %p176 = scmp.eq.s32.totalorder %s24, 0
    %p177 = por %p175, %p176
    %s179 = sadd.s32 %s178, 1
    %p182 = scmp.eq.s32.totalorder %s18, 1
    %p183 = scmp.ne.s32.totalorder %s178, %s180
    %p184 = scmp.eq.s32.totalorder %s18, 0
    %p185 = por %p183, %p184
    %p186 = scmp.ne.s32.totalorder %s178, %s180
    %p187 = scmp.eq.s32.totalorder %s23, 1
    %p188 = por %p186, %p187
    %p189 = scmp.ne.s32.totalorder %s180, %s181
    %p190 = scmp.eq.s32.totalorder %s23, 0
    %p191 = por %p189, %p190
    %p192 = scmp.ne.s32.totalorder %s180, %s181
    %p193 = scmp.eq.s32.totalorder %s24, 1
    %p194 = por %p192, %p193
    %p196 = scmp.ne.s32.totalorder %s181, %s195
    %p197 = scmp.eq.s32.totalorder %s24, 0
    %p198 = por %p196, %p197
    %s200 = sadd.s32 %s199, 1
    %p203 = scmp.eq.s32.totalorder %s18, 1
    %p204 = scmp.ne.s32.totalorder %s199, %s201
    %p205 = scmp.eq.s32.totalorder %s18, 0
    %p206 = por %p204, %p205
    %p207 = scmp.ne.s32.totalorder %s199, %s201
    %p208 = scmp.eq.s32.totalorder %s23, 1
    %p209 = por %p207, %p208
    %p210 = scmp.ne.s32.totalorder %s201, %s202
    %p211 = scmp.eq.s32.totalorder %s23, 0
    %p212 = por %p210, %p211
    %p213 = scmp.ne.s32.totalorder %s201, %s202
    %p214 = scmp.eq.s32.totalorder %s24, 1
    %p215 = por %p213, %p214
    %p217 = scmp.ne.s32.totalorder %s202, %s216
    %p218 = scmp.eq.s32.totalorder %s24, 0
    %p219 = por %p217, %p218
    %s221 = sadd.s32 %s220, 1
    %p224 = scmp.eq.s32.totalorder %s18, 1
    %p225 = scmp.ne.s32.totalorder %s220, %s222
    %p226 = scmp.eq.s32.totalorder %s18, 0
    %p227 = por %p225, %p226
    %p228 = scmp.ne.s32.totalorder %s220, %s222
    %p229 = scmp.eq.s32.totalorder %s23, 1
    %p230 = por %p228, %p229
    %p231 = scmp.ne.s32.totalorder %s222, %s223
    %p232 = scmp.eq.s32.totalorder %s23, 0
    %p233 = por %p231, %p232
    %p234 = scmp.ne.s32.totalorder %s222, %s223
    %p235 = scmp.eq.s32.totalorder %s24, 1
    %p236 = por %p234, %p235
    %p238 = scmp.ne.s32.totalorder %s223, %s237
    %p239 = scmp.eq.s32.totalorder %s24, 0
    %p240 = por %p238, %p239
    %s242 = sadd.s32 %s241, 1
    %p245 = scmp.eq.s32.totalorder %s18, 1
    %p246 = scmp.ne.s32.totalorder %s241, %s243
    %p247 = scmp.eq.s32.totalorder %s18, 0
    %p248 = por %p246, %p247
    %p249 = scmp.ne.s32.totalorder %s241, %s243
    %p250 = scmp.eq.s32.totalorder %s23, 1
    %p251 = por %p249, %p250
    %p252 = scmp.ne.s32.totalorder %s243, %s244
    %p253 = scmp.eq.s32.totalorder %s23, 0
    %p254 = por %p252, %p253
    %p255 = scmp.ne.s32.totalorder %s243, %s244
    %p256 = scmp.eq.s32.totalorder %s24, 1
    %p257 = por %p255, %p256
    %p259 = scmp.ne.s32.totalorder %s244, %s258
    %p260 = scmp.eq.s32.totalorder %s24, 0
    %p261 = por %p259, %p260
    %s262 = ssub.s32 %s26, %s33
    %s263 = ssub.s32 %s25, %s37
    %s264 = sor.u32 %s262, %s263
    %p265 = scmp.eq.s32.totalorder %s264, 0
    %s267 = sadd.s32 %s266, 1
    %s268 = scalar_select %p265, %s266, %s267
    %p271 = pneg %p265
    %p272 = scmp.eq.s32.totalorder %s18, 1
    %p273 = por %p271, %p272
    %p274 = scmp.ne.s32.totalorder %s266, %s269
    %p275 = scmp.eq.s32.totalorder %s18, 0
    %p276 = por %p274, %p275
    %p277 = scmp.ne.s32.totalorder %s266, %s269
    %p278 = scmp.eq.s32.totalorder %s23, 1
    %p279 = por %p277, %p278
    %p280 = scmp.ne.s32.totalorder %s269, %s270
    %p281 = scmp.eq.s32.totalorder %s23, 0
    %p282 = por %p280, %p281
    %p283 = scmp.ne.s32.totalorder %s269, %s270
    %p284 = scmp.eq.s32.totalorder %s24, 1
    %p285 = por %p283, %p284
    %p287 = scmp.ne.s32.totalorder %s270, %s286
    %p288 = scmp.eq.s32.totalorder %s24, 0
    %p289 = por %p287, %p288
    %s290 = ssub.s32 %s26, %s33
    %s291 = ssub.s32 %s25, %s37
    %s292 = sor.u32 %s290, %s291
    %p293 = scmp.eq.s32.totalorder %s292, 0
    %s295 = sadd.s32 %s294, 1
    %s296 = scalar_select %p293, %s294, %s295
    %p299 = pneg %p293
    %p300 = scmp.eq.s32.totalorder %s18, 1
    %p301 = por %p299, %p300
    %p302 = scmp.ne.s32.totalorder %s294, %s297
    %p303 = scmp.eq.s32.totalorder %s18, 0
    %p304 = por %p302, %p303
    %p305 = scmp.ne.s32.totalorder %s294, %s297
    %p306 = scmp.eq.s32.totalorder %s23, 1
    %p307 = por %p305, %p306
    %p308 = scmp.ne.s32.totalorder %s297, %s298
    %p309 = scmp.eq.s32.totalorder %s23, 0
    %p310 = por %p308, %p309
    %p311 = scmp.ne.s32.totalorder %s297, %s298
    %p312 = scmp.eq.s32.totalorder %s24, 1
    %p313 = por %p311, %p312
    %p315 = scmp.ne.s32.totalorder %s298, %s314
    %p316 = scmp.eq.s32.totalorder %s24, 0
    %p317 = por %p315, %p316
    %p318 = scmp.le.s32.totalorder 1, %s18
    %p319 = scmp.lt.s32.totalorder %s18, 3
    %p320 = pnand %p318, %p319
    %p321 = pneg %p320
    // Predicated region
    $region9: #{pointwise_gate5_forward.1} parent=5 // pred_check
      _
    $region10: #{pointwise_gate5_forward.1} parent=5 // pred_check_branch
      %323 = sbr.rel (%p320) target = $region12
    $region11: #{pointwise_gate5_forward.1} parent=5 // pred_region
      %s324 = ssub.s32 %s18, 1
      // Predicated region
      $region13: #{pointwise_gate5_forward.1} parent=11 // pred_check
        %p325 = pneg %p107
      $region14: #{pointwise_gate5_forward.1} parent=11 // pred_check_branch
        %327 = sbr.rel (%p325) target = $region16
      $region15: #{pointwise_gate5_forward.1} parent=11 // pred_region
        _
      $region16: #{pointwise_gate5_forward.1} parent=11 // pred_fallthru
        _
      // Predicated region
      $region17: #{pointwise_gate5_forward.1} parent=11 // pred_check
        %p328 = pneg %p128
      $region18: #{pointwise_gate5_forward.1} parent=11 // pred_check_branch
        %330 = sbr.rel (%p328) target = $region20
      $region19: #{pointwise_gate5_forward.1} parent=11 // pred_region
        _
      $region20: #{pointwise_gate5_forward.1} parent=11 // pred_fallthru
        _
      // Predicated region
      $region21: #{pointwise_gate5_forward.1} parent=11 // pred_check
        %p331 = pneg %p149
      $region22: #{pointwise_gate5_forward.1} parent=11 // pred_check_branch
        %333 = sbr.rel (%p331) target = $region24
      $region23: #{pointwise_gate5_forward.1} parent=11 // pred_region
        _
      $region24: #{pointwise_gate5_forward.1} parent=11 // pred_fallthru
        _
      // Predicated region
      $region25: #{pointwise_gate5_forward.1} parent=11 // pred_check
        %p334 = pneg %p170
      $region26: #{pointwise_gate5_forward.1} parent=11 // pred_check_branch
        %336 = sbr.rel (%p334) target = $region28
      $region27: #{pointwise_gate5_forward.1} parent=11 // pred_region
        _
      $region28: #{pointwise_gate5_forward.1} parent=11 // pred_fallthru
        _
      // Predicated region
      $region29: #{pointwise_gate5_forward.1} parent=11 // pred_check
        %p337 = pneg %p191
      $region30: #{pointwise_gate5_forward.1} parent=11 // pred_check_branch
        %339 = sbr.rel (%p337) target = $region32
      $region31: #{pointwise_gate5_forward.1} parent=11 // pred_region
        _
      $region32: #{pointwise_gate5_forward.1} parent=11 // pred_fallthru
        _
      // Predicated region
      $region33: #{pointwise_gate5_forward.1} parent=11 // pred_check
        %p340 = pneg %p212
      $region34: #{pointwise_gate5_forward.1} parent=11 // pred_check_branch
        %342 = sbr.rel (%p340) target = $region36
      $region35: #{pointwise_gate5_forward.1} parent=11 // pred_region
        _
      $region36: #{pointwise_gate5_forward.1} parent=11 // pred_fallthru
        _
      // Predicated region
      $region37: #{pointwise_gate5_forward.1} parent=11 // pred_check
        %p343 = pneg %p233
      $region38: #{pointwise_gate5_forward.1} parent=11 // pred_check_branch
        %345 = sbr.rel (%p343) target = $region40
      $region39: #{pointwise_gate5_forward.1} parent=11 // pred_region
        _
      $region40: #{pointwise_gate5_forward.1} parent=11 // pred_fallthru
        _
      // Predicated region
      $region41: #{pointwise_gate5_forward.1} parent=11 // pred_check
        %p346 = pneg %p254
      $region42: #{pointwise_gate5_forward.1} parent=11 // pred_check_branch
        %348 = sbr.rel (%p346) target = $region44
      $region43: #{pointwise_gate5_forward.1} parent=11 // pred_region
        _
      $region44: #{pointwise_gate5_forward.1} parent=11 // pred_fallthru
        _
    $region12: #{pointwise_gate5_forward.1} parent=5 // pred_fallthru
      _
    %p349 = scmp.lt.s32.totalorder %s18, 2
    // Predicated region
    $region45: #{pointwise_gate5_forward.1} parent=5 // pred_check
      %p350 = pneg %p349
    $region46: #{pointwise_gate5_forward.1} parent=5 // pred_check_branch
      %352 = sbr.rel (%p350) target = $region48
    $region47: #{pointwise_gate5_forward.1} parent=5 // pred_region
      // Predicated region
      $region49: #{pointwise_gate5_forward.1} parent=47 // pred_check
        %p353 = pneg %p52
      $region50: #{pointwise_gate5_forward.1} parent=47 // pred_check_branch
        %355 = sbr.rel (%p353) target = $region52
      $region51: #{pointwise_gate5_forward.1} parent=47 // pred_region
        %s356 = smul.u32 4, %s25
        %p357 = scmp.lt.s32.totalorder %s26, 1
        %s358 = scalar_select %p357, %s26, 1
        %p359 = scmp.lt.s32.totalorder %s356, 3
        %s360 = scalar_select %p359, %s356, 3
        %s361 = smul.addr %s358, 24
        %s362 = sadd.s32 %s360, %s361
        %s363 = smul.addr %s362, 4
        %s364 = scalar_lea.vmem %s0, %s363
        %s365 = smul.u32 4, %s25
      $region52: #{pointwise_gate5_forward.1} parent=47 // pred_fallthru
        _
      // Predicated region
      $region53: #{pointwise_gate5_forward.1} parent=47 // pred_check
        %p366 = pneg %p80
      $region54: #{pointwise_gate5_forward.1} parent=47 // pred_check_branch
        %368 = sbr.rel (%p366) target = $region56
      $region55: #{pointwise_gate5_forward.1} parent=47 // pred_region
        %s369 = smul.u32 4, %s25
        %p370 = scmp.lt.s32.totalorder %s26, 1
        %s371 = scalar_select %p370, %s26, 1
        %p372 = scmp.lt.s32.totalorder %s369, 3
        %s373 = scalar_select %p372, %s369, 3
        %s374 = smul.addr %s371, 16
        %s375 = sadd.s32 %s373, %s374
        %s376 = smul.addr %s375, 4
        %s377 = scalar_lea.vmem %s1, %s376
        %s378 = smul.u32 4, %s25
      $region56: #{pointwise_gate5_forward.1} parent=47 // pred_fallthru
        _
    $region48: #{pointwise_gate5_forward.1} parent=5 // pred_fallthru
      _
    %p379 = scmp.le.s32.totalorder 1, %s18
    %p380 = scmp.lt.s32.totalorder %s18, 3
    %p381 = pnand %p379, %p380
    %p382 = pneg %p381
    // Predicated region
    $region57: #{pointwise_gate5_forward.1} parent=5 // pred_check
      _
    $region58: #{pointwise_gate5_forward.1} parent=5 // pred_check_branch
      %384 = sbr.rel (%p381) target = $region60
    $region59: #{pointwise_gate5_forward.1} parent=5 // pred_region
      %s385 = ssub.s32 %s18, 1
      %s386 = smul.u32 4, %s27
      %p387 = scmp.lt.s32.totalorder %s28, 1
      %s388 = scalar_select %p387, %s28, 1
      %p389 = scmp.lt.s32.totalorder %s386, 3
      %s390 = scalar_select %p389, %s386, 3
      %s391 = smul.addr %s388, 24
      %s392 = sadd.s32 %s390, %s391
      %s393 = smul.addr %s392, 4
      %s394 = scalar_lea.vmem %s0, %s393
      %p395 = pneg %p58
      %p396 = pneg %p55
      %s397 = smul.u32 4, %s27
      %p398 = scmp.lt.s32.totalorder %s28, 1
      %s399 = scalar_select %p398, %s28, 1
      %p400 = scmp.lt.s32.totalorder %s397, 3
      %s401 = scalar_select %p400, %s397, 3
      %s402 = smul.addr %s399, 16
      %s403 = sadd.s32 %s401, %s402
      %s404 = smul.addr %s403, 4
      %s405 = scalar_lea.vmem %s1, %s404
      %p406 = pneg %p86
      %p407 = pneg %p83
      %p408 = pneg %p107
      %p409 = pneg %p104
      %p410 = pneg %p128
      %p411 = pneg %p125
      %p412 = pneg %p149
      %p413 = pneg %p146
      %p414 = pneg %p170
      %p415 = pneg %p167
      %p416 = pneg %p191
      %p417 = pneg %p188
      %p418 = pneg %p212
      %p419 = pneg %p209
      %p420 = pneg %p233
      %p421 = pneg %p230
      %p422 = pneg %p254
      %p423 = pneg %p251
      %p424 = pneg %p282
      %p425 = pneg %p279
      %s426 = smul.u32 4, %s27
      %p427 = scmp.lt.s32.totalorder %s28, 1
      %s428 = scalar_select %p427, %s28, 1
      %p429 = scmp.lt.s32.totalorder %s426, 3
      %s430 = scalar_select %p429, %s426, 3
      %s431 = smul.addr %s428, 16
      %s432 = sadd.s32 %s430, %s431
      %s433 = smul.addr %s432, 4
      %s434 = scalar_lea.vmem %s10, %s433
      %p435 = pneg %p310
      %p436 = pneg %p307
      %p437 = scmp.lt.s32.totalorder %s28, 1
      %s438 = scalar_select %p437, %s28, 1
      %p439 = scmp.lt.s32.totalorder %s27, 0
      %s440 = scalar_select %p439, %s27, 0
      %s441 = smul.addr %s440, 4
      %s442 = smul.addr %s438, 4
      %s443 = sadd.s32 %s441, %s442
      %s444 = smul.addr %s443, 8
      %s445 = scalar_lea.vmem %s11, %s444
      %s446 = smul.u32 4, %s27
      %p447 = scmp.lt.s32.totalorder %s28, 1
      %s448 = scalar_select %p447, %s28, 1
      %p449 = scmp.lt.s32.totalorder %s446, 3
      %s450 = scalar_select %p449, %s446, 3
      %s451 = smul.addr %s448, 24
      %s452 = sadd.s32 %s450, %s451
      %s453 = smul.addr %s452, 4
      %s454 = scalar_lea.vmem %s0, %s453
      %s455 = smul.u32 4, %s27
      %s456 = smul.u32 4, %s27
      %p457 = scmp.lt.s32.totalorder %s28, 1
      %s458 = scalar_select %p457, %s28, 1
      %p459 = scmp.lt.s32.totalorder %s456, 3
      %s460 = scalar_select %p459, %s456, 3
      %s461 = smul.addr %s458, 16
      %s462 = sadd.s32 %s460, %s461
      %s463 = smul.addr %s462, 4
      %s464 = scalar_lea.vmem %s1, %s463
      %s465 = smul.u32 4, %s27
      %s466 = smul.u32 4, %s27
      %p467 = scmp.lt.s32.totalorder %s28, 1
      %s468 = scalar_select %p467, %s28, 1
      %p469 = scmp.lt.s32.totalorder %s466, 3
      %s470 = scalar_select %p469, %s466, 3
      %s471 = smul.addr %s468, 16
      %s472 = sadd.s32 %s470, %s471
      %s473 = smul.addr %s472, 4
      %s474 = scalar_lea.vmem %s10, %s473
      %s475 = smul.u32 4, %s27
      %p476 = scmp.lt.s32.totalorder %s28, 1
      %s477 = scalar_select %p476, %s28, 1
      %p478 = scmp.lt.s32.totalorder %s27, 0
      %s479 = scalar_select %p478, %s27, 0
      %s480 = smul.addr %s479, 4
      %s481 = smul.addr %s477, 4
      %s482 = sadd.s32 %s480, %s481
      %s483 = smul.addr %s482, 8
      %s484 = scalar_lea.vmem %s11, %s483
      %v486 = vld [vmem:[%s454] sm:$0xff]
      %v487 = vld [vmem:[%s454 + $0x8] sm:$0xff]
      %v488 = vld [vmem:[%s454 + $0x10] sm:$0xff]
      %v489 = vld [vmem:[%s454 + $0x18] sm:$0xff]
      %v490 = vld [vmem:[%s454 + $0x20] sm:$0xff]
      %v491 = vld [vmem:[%s454 + $0x28] sm:$0xff]
      %v492 = vld [vmem:[%s454 + $0x30] sm:$0xff]
      %v493 = vld [vmem:[%s454 + $0x38] sm:$0xff]
      %v494 = vld [vmem:[%s454 + $0x40] sm:$0xff]
      %v495 = vld [vmem:[%s454 + $0x48] sm:$0xff]
      %v496 = vld [vmem:[%s454 + $0x50] sm:$0xff]
      %v497 = vld [vmem:[%s454 + $0x58] sm:$0xff]
      %v498 = vld [vmem:[%s464] sm:$0xff]
      %v499 = vld [vmem:[%s464 + $0x8] sm:$0xff]
      %v500 = vld [vmem:[%s464 + $0x10] sm:$0xff]
      %v501 = vld [vmem:[%s464 + $0x18] sm:$0xff]
      %v502 = vld [vmem:[%s464 + $0x20] sm:$0xff]
      %v503 = vld [vmem:[%s464 + $0x28] sm:$0xff]
      %v504 = vld [vmem:[%s464 + $0x30] sm:$0xff]
      %v505 = vld [vmem:[%s464 + $0x38] sm:$0xff]
      %v506 = vld [vmem:[%s2] sm:$0xf]
      %v507 = vld [vmem:[%s2 + $0x4] sm:$0xf]
      %v508 = vld [vmem:[%s2 + $0x8] sm:$0xf]
      %v509 = vld [vmem:[%s2 + $0xc] sm:$0xf]
      %v510 = vld [vmem:[%s3] sm:$0xf]
      %v511 = vld [vmem:[%s3 + $0x4] sm:$0xf]
      %v512 = vld [vmem:[%s3 + $0x8] sm:$0xf]
      %v513 = vld [vmem:[%s3 + $0xc] sm:$0xf]
      %v518 = vunpack.c.l.b16 %v510
      %v519 = vunpack.c.l.b16 %v511
      %v520 = vunpack.c.l.b16 %v512
      %v521 = vunpack.c.l.b16 %v513
      %v522 = vpack.c.b16 %v519, %v518
      %v523 = vpack.c.b16 %v521, %v520
      %v532 = vunpack.c.l.b16 %v498
      %v533 = vunpack.c.h.b16 %v498
      %v534 = vunpack.c.l.b16 %v499
      %v535 = vunpack.c.h.b16 %v499
      %v536 = vunpack.c.l.b16 %v500
      %v537 = vunpack.c.h.b16 %v500
      %v538 = vunpack.c.l.b16 %v501
      %v539 = vunpack.c.h.b16 %v501
      %v540 = vunpack.c.l.b16 %v502
      %v541 = vunpack.c.h.b16 %v502
      %v542 = vunpack.c.l.b16 %v503
      %v543 = vunpack.c.h.b16 %v503
      %v544 = vunpack.c.l.b16 %v504
      %v545 = vunpack.c.h.b16 %v504
      %v546 = vunpack.c.l.b16 %v505
      %v547 = vunpack.c.h.b16 %v505
      %v548 = vpack.c.b16 %v536, %v532
      %v549 = vpack.c.b16 %v537, %v533
      %v550 = vpack.c.b16 %v538, %v534
      %v551 = vpack.c.b16 %v539, %v535
      %v552 = vpack.c.b16 %v544, %v540
      %v553 = vpack.c.b16 %v545, %v541
      %v554 = vpack.c.b16 %v546, %v542
      %v555 = vpack.c.b16 %v547, %v543
      %vm564 = vcmask 261120
      %v566 = vsel %vm564, %v522, 0
      %v569 = vsel %vm564, %v523, 0
      %571 = vmatprep.subr.bf16.mxu0 0
      %572 = vmatpush1.bf16.msra.mxu0 0
      %573 = vmatprep.subr.bf16.mxu0 0
      %574 = vmatpush1.bf16.msra.mxu0 0
      %575 = vmatprep.subr.bf16.mxu0 0
      %576 = vmatpush1.bf16.msra.mxu0 0
      %577 = vmatprep.subr.bf16.mxu0 0
      %578 = vmatpush1.bf16.msra.mxu0 0
      %579 = vmatprep.subr.bf16.mxu0 0
      %580 = vmatpush1.bf16.msra.mxu0 0
      %581 = vmatprep.subr.bf16.mxu0 0
      %582 = vmatpush1.bf16.msra.mxu0 0
      %583 = vmatprep.subr.bf16.mxu0 %v553
      %584 = vmatpush1.bf16.msra.mxu0 %v552
      %585 = vmatprep.subr.bf16.mxu0 %v549
      %586 = vmatpush1.bf16.msra.mxu0 %v548
      %587 = vmatprep.subr.bf16.mxu0 0
      %588 = vmatpush2.bf16.msra.mxu0 0
      %589 = vmatprep.subr.bf16.mxu0 0
      %590 = vmatpush2.bf16.msra.mxu0 0
      %591 = vmatprep.subr.bf16.mxu0 0
      %592 = vmatpush2.bf16.msra.mxu0 0
      %593 = vmatprep.subr.bf16.mxu0 0
      %594 = vmatpush2.bf16.msra.mxu0 0
      %595 = vmatprep.subr.bf16.mxu0 0
      %596 = vmatpush2.bf16.msra.mxu0 0
      %597 = vmatprep.subr.bf16.mxu0 0
      %598 = vmatpush2.bf16.msra.mxu0 0
      %599 = vmatprep.subr.bf16.mxu0 0
      %600 = vmatpush2.bf16.msra.mxu0 0
      %601 = vmatprep.subr.bf16.mxu0 0
      %602 = vmatpush2.bf16.msra.mxu0 0
      %603 = vmatprep.mubr.bf16.mxu0 0
      %604 = vmatmul.mubr.bf16.gmra.mxu0 %v566
      %v605 = vpop.f32.mrf.mxu0
      %v606 = vadd.f32 0.0, %v605
      %v607 = vpop.f32.mrf.mxu0
      %v608 = vadd.f32 0.0, %v607
      %v609 = vpop.f32.mrf.mxu0
      %v610 = vadd.f32 0.0, %v609
      %v611 = vpop.f32.mrf.mxu0
      %v612 = vadd.f32 0.0, %v611
      %613 = vmatprep.mubr.bf16.mxu0 0
      %614 = vmatmul.mubr.bf16.gmra.mxu0 %v569
      %v615 = vpop.f32.mrf.mxu0
      %v616 = vadd.f32 0.0, %v615
      %v617 = vpop.f32.mrf.mxu0
      %v618 = vadd.f32 0.0, %v617
      %v619 = vpop.f32.mrf.mxu0
      %v620 = vadd.f32 0.0, %v619
      %v621 = vpop.f32.mrf.mxu0
      %v622 = vadd.f32 0.0, %v621
      %623 = vdwg.mxu0
      %624 = vmatprep.subr.bf16.mxu0 0
      %625 = vmatpush1.bf16.msra.mxu0 0
      %626 = vmatprep.subr.bf16.mxu0 0
      %627 = vmatpush1.bf16.msra.mxu0 0
      %628 = vmatprep.subr.bf16.mxu0 0
      %629 = vmatpush1.bf16.msra.mxu0 0
      %630 = vmatprep.subr.bf16.mxu0 0
      %631 = vmatpush1.bf16.msra.mxu0 0
      %632 = vmatprep.subr.bf16.mxu0 0
      %633 = vmatpush1.bf16.msra.mxu0 0
      %634 = vmatprep.subr.bf16.mxu0 0
      %635 = vmatpush1.bf16.msra.mxu0 0
      %636 = vmatprep.subr.bf16.mxu0 %v555
      %637 = vmatpush1.bf16.msra.mxu0 %v554
      %638 = vmatprep.subr.bf16.mxu0 %v551
      %639 = vmatpush1.bf16.msra.mxu0 %v550
      %640 = vmatprep.subr.bf16.mxu0 0
      %641 = vmatpush2.bf16.msra.mxu0 0
      %642 = vmatprep.subr.bf16.mxu0 0
      %643 = vmatpush2.bf16.msra.mxu0 0
      %644 = vmatprep.subr.bf16.mxu0 0
      %645 = vmatpush2.bf16.msra.mxu0 0
      %646 = vmatprep.subr.bf16.mxu0 0
      %647 = vmatpush2.bf16.msra.mxu0 0
      %648 = vmatprep.subr.bf16.mxu0 0
      %649 = vmatpush2.bf16.msra.mxu0 0
      %650 = vmatprep.subr.bf16.mxu0 0
      %651 = vmatpush2.bf16.msra.mxu0 0
      %652 = vmatprep.subr.bf16.mxu0 0
      %653 = vmatpush2.bf16.msra.mxu0 0
      %654 = vmatprep.subr.bf16.mxu0 0
      %655 = vmatpush2.bf16.msra.mxu0 0
      %656 = vmatprep.mubr.bf16.mxu0 0
      %657 = vmatmul.mubr.bf16.gmra.mxu0 %v566
      %v658 = vpop.f32.mrf.mxu0
      %v659 = vadd.f32 0.0, %v658
      %v660 = vpop.f32.mrf.mxu0
      %v661 = vadd.f32 0.0, %v660
      %v662 = vpop.f32.mrf.mxu0
      %v663 = vadd.f32 0.0, %v662
      %v664 = vpop.f32.mrf.mxu0
      %v665 = vadd.f32 0.0, %v664
      %666 = vmatprep.mubr.bf16.mxu0 0
      %667 = vmatmul.mubr.bf16.gmra.mxu0 %v569
      %v668 = vpop.f32.mrf.mxu0
      %v669 = vadd.f32 0.0, %v668
      %v670 = vpop.f32.mrf.mxu0
      %v671 = vadd.f32 0.0, %v670
      %v672 = vpop.f32.mrf.mxu0
      %v673 = vadd.f32 0.0, %v672
      %v674 = vpop.f32.mrf.mxu0
      %v675 = vadd.f32 0.0, %v674
      %676 = vdwg.mxu0
      %v681 = vunpack.c.l.b16 %v506
      %v682 = vunpack.c.l.b16 %v507
      %v683 = vunpack.c.l.b16 %v508
      %v684 = vunpack.c.l.b16 %v509
      %v685 = vpack.c.b16 %v682, %v681
      %v686 = vpack.c.b16 %v684, %v683
      %v699 = vunpack.c.l.b16 %v486
      %v700 = vunpack.c.h.b16 %v486
      %v701 = vunpack.c.l.b16 %v487
      %v702 = vunpack.c.h.b16 %v487
      %v703 = vunpack.c.l.b16 %v488
      %v704 = vunpack.c.h.b16 %v488
      %v705 = vunpack.c.l.b16 %v489
      %v706 = vunpack.c.h.b16 %v489
      %v707 = vunpack.c.l.b16 %v490
      %v708 = vunpack.c.h.b16 %v490
      %v709 = vunpack.c.l.b16 %v491
      %v710 = vunpack.c.h.b16 %v491
      %v711 = vunpack.c.l.b16 %v492
      %v712 = vunpack.c.h.b16 %v492
      %v713 = vunpack.c.l.b16 %v493
      %v714 = vunpack.c.h.b16 %v493
      %v715 = vunpack.c.l.b16 %v494
      %v716 = vunpack.c.h.b16 %v494
      %v717 = vunpack.c.l.b16 %v495
      %v718 = vunpack.c.h.b16 %v495
      %v719 = vunpack.c.l.b16 %v496
      %v720 = vunpack.c.h.b16 %v496
      %v721 = vunpack.c.l.b16 %v497
      %v722 = vunpack.c.h.b16 %v497
      %v723 = vpack.c.b16 %v703, %v699
      %v724 = vpack.c.b16 %v704, %v700
      %v725 = vpack.c.b16 %v705, %v701
      %v726 = vpack.c.b16 %v706, %v702
      %v727 = vpack.c.b16 %v711, %v707
      %v728 = vpack.c.b16 %v712, %v708
      %v729 = vpack.c.b16 %v713, %v709
      %v730 = vpack.c.b16 %v714, %v710
      %v731 = vpack.c.b16 %v719, %v715
      %v732 = vpack.c.b16 %v720, %v716
      %v733 = vpack.c.b16 %v721, %v717
      %v734 = vpack.c.b16 %v722, %v718
      %vm747 = vcmask 392192
      %v749 = vsel %vm747, %v685, 0
      %v752 = vsel %vm747, %v686, 0
      %754 = vmatprep.subr.bf16.mxu0 0
      %755 = vmatpush1.bf16.msra.mxu0 0
      %756 = vmatprep.subr.bf16.mxu0 0
      %757 = vmatpush1.bf16.msra.mxu0 0
      %758 = vmatprep.subr.bf16.mxu0 0
      %759 = vmatpush1.bf16.msra.mxu0 0
      %760 = vmatprep.subr.bf16.mxu0 0
      %761 = vmatpush1.bf16.msra.mxu0 0
      %762 = vmatprep.subr.bf16.mxu0 0
      %763 = vmatpush1.bf16.msra.mxu0 0
      %764 = vmatprep.subr.bf16.mxu0 %v732
      %765 = vmatpush1.bf16.msra.mxu0 %v731
      %766 = vmatprep.subr.bf16.mxu0 %v728
      %767 = vmatpush1.bf16.msra.mxu0 %v727
      %768 = vmatprep.subr.bf16.mxu0 %v724
      %769 = vmatpush1.bf16.msra.mxu0 %v723
      %770 = vmatprep.subr.bf16.mxu0 0
      %771 = vmatpush2.bf16.msra.mxu0 0
      %772 = vmatprep.subr.bf16.mxu0 0
      %773 = vmatpush2.bf16.msra.mxu0 0
      %774 = vmatprep.subr.bf16.mxu0 0
      %775 = vmatpush2.bf16.msra.mxu0 0
      %776 = vmatprep.subr.bf16.mxu0 0
      %777 = vmatpush2.bf16.msra.mxu0 0
      %778 = vmatprep.subr.bf16.mxu0 0
      %779 = vmatpush2.bf16.msra.mxu0 0
      %780 = vmatprep.subr.bf16.mxu0 0
      %781 = vmatpush2.bf16.msra.mxu0 0
      %782 = vmatprep.subr.bf16.mxu0 0
      %783 = vmatpush2.bf16.msra.mxu0 0
      %784 = vmatprep.subr.bf16.mxu0 0
      %785 = vmatpush2.bf16.msra.mxu0 0
      %786 = vmatprep.mubr.bf16.mxu0 0
      %787 = vmatmul.mubr.bf16.gmra.mxu0 %v749
      %v788 = vpop.f32.mrf.mxu0
      %v789 = vadd.f32 %v606, %v788
      %v790 = vpop.f32.mrf.mxu0
      %v791 = vadd.f32 %v608, %v790
      %v792 = vpop.f32.mrf.mxu0
      %v793 = vadd.f32 %v610, %v792
      %v794 = vpop.f32.mrf.mxu0
      %v795 = vadd.f32 %v612, %v794
      %796 = vmatprep.mubr.bf16.mxu0 0
      %797 = vmatmul.mubr.bf16.gmra.mxu0 %v752
      %v798 = vpop.f32.mrf.mxu0
      %v799 = vadd.f32 %v616, %v798
      %v800 = vpop.f32.mrf.mxu0
      %v801 = vadd.f32 %v618, %v800
      %v802 = vpop.f32.mrf.mxu0
      %v803 = vadd.f32 %v620, %v802
      %v804 = vpop.f32.mrf.mxu0
      %v805 = vadd.f32 %v622, %v804
      %806 = vdwg.mxu0
      %807 = vmatprep.subr.bf16.mxu0 0
      %808 = vmatpush1.bf16.msra.mxu0 0
      %809 = vmatprep.subr.bf16.mxu0 0
      %810 = vmatpush1.bf16.msra.mxu0 0
      %811 = vmatprep.subr.bf16.mxu0 0
      %812 = vmatpush1.bf16.msra.mxu0 0
      %813 = vmatprep.subr.bf16.mxu0 0
      %814 = vmatpush1.bf16.msra.mxu0 0
      %815 = vmatprep.subr.bf16.mxu0 0
      %816 = vmatpush1.bf16.msra.mxu0 0
      %817 = vmatprep.subr.bf16.mxu0 %v734
      %818 = vmatpush1.bf16.msra.mxu0 %v733
      %819 = vmatprep.subr.bf16.mxu0 %v730
      %820 = vmatpush1.bf16.msra.mxu0 %v729
      %821 = vmatprep.subr.bf16.mxu0 %v726
      %822 = vmatpush1.bf16.msra.mxu0 %v725
      %823 = vmatprep.subr.bf16.mxu0 0
      %824 = vmatpush2.bf16.msra.mxu0 0
      %825 = vmatprep.subr.bf16.mxu0 0
      %826 = vmatpush2.bf16.msra.mxu0 0
      %827 = vmatprep.subr.bf16.mxu0 0
      %828 = vmatpush2.bf16.msra.mxu0 0
      %829 = vmatprep.subr.bf16.mxu0 0
      %830 = vmatpush2.bf16.msra.mxu0 0
      %831 = vmatprep.subr.bf16.mxu0 0
      %832 = vmatpush2.bf16.msra.mxu0 0
      %833 = vmatprep.subr.bf16.mxu0 0
      %834 = vmatpush2.bf16.msra.mxu0 0
      %835 = vmatprep.subr.bf16.mxu0 0
      %836 = vmatpush2.bf16.msra.mxu0 0
      %837 = vmatprep.subr.bf16.mxu0 0
      %838 = vmatpush2.bf16.msra.mxu0 0
      %839 = vmatprep.mubr.bf16.mxu0 0
      %840 = vmatmul.mubr.bf16.gmra.mxu0 %v749
      %v841 = vpop.f32.mrf.mxu0
      %v842 = vadd.f32 %v659, %v841
      %v843 = vpop.f32.mrf.mxu0
      %v844 = vadd.f32 %v661, %v843
      %v845 = vpop.f32.mrf.mxu0
      %v846 = vadd.f32 %v663, %v845
      %v847 = vpop.f32.mrf.mxu0
      %v848 = vadd.f32 %v665, %v847
      %849 = vmatprep.mubr.bf16.mxu0 0
      %850 = vmatmul.mubr.bf16.gmra.mxu0 %v752
      %v851 = vpop.f32.mrf.mxu0
      %v852 = vadd.f32 %v669, %v851
      %v853 = vpop.f32.mrf.mxu0
      %v854 = vadd.f32 %v671, %v853
      %v855 = vpop.f32.mrf.mxu0
      %v856 = vadd.f32 %v673, %v855
      %v857 = vpop.f32.mrf.mxu0
      %v858 = vadd.f32 %v675, %v857
      %859 = vdwg.mxu0
      %v860 = vld [vmem:[%s4] sm:$0xff]
      %v861 = vld [vmem:[%s4 + $0x8] sm:$0xff]
      %v862 = vld [vmem:[%s4 + $0x10] sm:$0xff]
      %v863 = vld [vmem:[%s4 + $0x18] sm:$0xff]
      %865 = vset.pattern.permute.xlu0 0
      %866 = vperm.xlu0 %865, %v860
      %v867 = vpop.permute.xlu0 %866
      %870 = vset.pattern.permute.xlu0 0
      %871 = vperm.xlu0 %870, %v861
      %v872 = vpop.permute.xlu0 %871
      %875 = vset.pattern.permute.xlu0 0
      %876 = vperm.xlu0 %875, %v862
      %v877 = vpop.permute.xlu0 %876
      %880 = vset.pattern.permute.xlu0 0
      %881 = vperm.xlu0 %880, %v863
      %v882 = vpop.permute.xlu0 %881
      %v884 = vadd.f32 %v789, %v867
      %v885 = vadd.f32 %v791, %v867
      %v886 = vadd.f32 %v842, %v867
      %v887 = vadd.f32 %v844, %v867
      %v888 = vadd.f32 %v793, %v872
      %v889 = vadd.f32 %v795, %v872
      %v890 = vadd.f32 %v846, %v872
      %v891 = vadd.f32 %v848, %v872
      %v892 = vadd.f32 %v799, %v877
      %v893 = vadd.f32 %v801, %v877
      %v894 = vadd.f32 %v852, %v877
      %v895 = vadd.f32 %v854, %v877
      %v896 = vadd.f32 %v803, %v882
      %v897 = vadd.f32 %v805, %v882
      %v898 = vadd.f32 %v856, %v882
      %v899 = vadd.f32 %v858, %v882
      %v900 = vmax.f32 %v884, 0.0
      %v901 = vmax.f32 %v885, 0.0
      %v902 = vmax.f32 %v886, 0.0
      %v903 = vmax.f32 %v887, 0.0
      %v904 = vmax.f32 %v888, 0.0
      %v905 = vmax.f32 %v889, 0.0
      %v906 = vmax.f32 %v890, 0.0
      %v907 = vmax.f32 %v891, 0.0
      %v908 = vmax.f32 %v892, 0.0
      %v909 = vmax.f32 %v893, 0.0
      %v910 = vmax.f32 %v894, 0.0
      %v911 = vmax.f32 %v895, 0.0
      %v912 = vmax.f32 %v896, 0.0
      %v913 = vmax.f32 %v897, 0.0
      %v914 = vmax.f32 %v898, 0.0
      %v915 = vmax.f32 %v899, 0.0
      %v916 = vld [vmem:[%s5] sm:$0xf]
      %v917 = vld [vmem:[%s5 + $0x4] sm:$0xf]
      %v918 = vpack.c.bf16 %v904, %v900
      %v919 = vpack.c.bf16 %v905, %v901
      %v920 = vpack.c.bf16 %v906, %v902
      %v921 = vpack.c.bf16 %v907, %v903
      %v922 = vpack.c.bf16 %v912, %v908
      %v923 = vpack.c.bf16 %v913, %v909
      %v924 = vpack.c.bf16 %v914, %v910
      %v925 = vpack.c.bf16 %v915, %v911
      %v928 = vunpack.c.l.b16 %v916
      %v929 = vunpack.c.l.b16 %v917
      %v930 = vpack.c.b16 %v929, %v928
      %v932 = vsel %vm564, %v930, 0
      %934 = vmatprep.subr.bf16.mxu0 0
      %935 = vmatpush1.bf16.msra.mxu0 0
      %936 = vmatprep.subr.bf16.mxu0 0
      %937 = vmatpush1.bf16.msra.mxu0 0
      %938 = vmatprep.subr.bf16.mxu0 0
      %939 = vmatpush1.bf16.msra.mxu0 0
      %940 = vmatprep.subr.bf16.mxu0 0
      %941 = vmatpush1.bf16.msra.mxu0 0
      %942 = vmatprep.subr.bf16.mxu0 0
      %943 = vmatpush1.bf16.msra.mxu0 0
      %944 = vmatprep.subr.bf16.mxu0 0
      %945 = vmatpush1.bf16.msra.mxu0 0
      %946 = vmatprep.subr.bf16.mxu0 %v923
      %947 = vmatpush1.bf16.msra.mxu0 %v922
      %948 = vmatprep.subr.bf16.mxu0 %v919
      %949 = vmatpush1.bf16.msra.mxu0 %v918
      %950 = vmatprep.subr.bf16.mxu0 0
      %951 = vmatpush2.bf16.msra.mxu0 0
      %952 = vmatprep.subr.bf16.mxu0 0
      %953 = vmatpush2.bf16.msra.mxu0 0
      %954 = vmatprep.subr.bf16.mxu0 0
      %955 = vmatpush2.bf16.msra.mxu0 0
      %956 = vmatprep.subr.bf16.mxu0 0
      %957 = vmatpush2.bf16.msra.mxu0 0
      %958 = vmatprep.subr.bf16.mxu0 0
      %959 = vmatpush2.bf16.msra.mxu0 0
      %960 = vmatprep.subr.bf16.mxu0 0
      %961 = vmatpush2.bf16.msra.mxu0 0
      %962 = vmatprep.subr.bf16.mxu0 0
      %963 = vmatpush2.bf16.msra.mxu0 0
      %964 = vmatprep.subr.bf16.mxu0 0
      %965 = vmatpush2.bf16.msra.mxu0 0
      %966 = vmatprep.mubr.bf16.mxu0 0
      %967 = vmatmul.mubr.bf16.gmra.mxu0 %v932
      %v968 = vpop.f32.mrf.mxu0
      %v969 = vadd.f32 0.0, %v968
      %v970 = vpop.f32.mrf.mxu0
      %v971 = vadd.f32 0.0, %v970
      %v972 = vpop.f32.mrf.mxu0
      %v973 = vadd.f32 0.0, %v972
      %v974 = vpop.f32.mrf.mxu0
      %v975 = vadd.f32 0.0, %v974
      %976 = vdwg.mxu0
      %977 = vmatprep.subr.bf16.mxu0 0
      %978 = vmatpush1.bf16.msra.mxu0 0
      %979 = vmatprep.subr.bf16.mxu0 0
      %980 = vmatpush1.bf16.msra.mxu0 0
      %981 = vmatprep.subr.bf16.mxu0 0
      %982 = vmatpush1.bf16.msra.mxu0 0
      %983 = vmatprep.subr.bf16.mxu0 0
      %984 = vmatpush1.bf16.msra.mxu0 0
      %985 = vmatprep.subr.bf16.mxu0 0
      %986 = vmatpush1.bf16.msra.mxu0 0
      %987 = vmatprep.subr.bf16.mxu0 0
      %988 = vmatpush1.bf16.msra.mxu0 0
      %989 = vmatprep.subr.bf16.mxu0 %v925
      %990 = vmatpush1.bf16.msra.mxu0 %v924
      %991 = vmatprep.subr.bf16.mxu0 %v921
      %992 = vmatpush1.bf16.msra.mxu0 %v920
      %993 = vmatprep.subr.bf16.mxu0 0
      %994 = vmatpush2.bf16.msra.mxu0 0
      %995 = vmatprep.subr.bf16.mxu0 0
      %996 = vmatpush2.bf16.msra.mxu0 0
      %997 = vmatprep.subr.bf16.mxu0 0
      %998 = vmatpush2.bf16.msra.mxu0 0
      %999 = vmatprep.subr.bf16.mxu0 0
      %1000 = vmatpush2.bf16.msra.mxu0 0
      %1001 = vmatprep.subr.bf16.mxu0 0
      %1002 = vmatpush2.bf16.msra.mxu0 0
      %1003 = vmatprep.subr.bf16.mxu0 0
      %1004 = vmatpush2.bf16.msra.mxu0 0
      %1005 = vmatprep.subr.bf16.mxu0 0
      %1006 = vmatpush2.bf16.msra.mxu0 0
      %1007 = vmatprep.subr.bf16.mxu0 0
      %1008 = vmatpush2.bf16.msra.mxu0 0
      %1009 = vmatprep.mubr.bf16.mxu0 0
      %1010 = vmatmul.mubr.bf16.gmra.mxu0 %v932
      %v1011 = vpop.f32.mrf.mxu0
      %v1012 = vadd.f32 0.0, %v1011
      %v1013 = vpop.f32.mrf.mxu0
      %v1014 = vadd.f32 0.0, %v1013
      %v1015 = vpop.f32.mrf.mxu0
      %v1016 = vadd.f32 0.0, %v1015
      %v1017 = vpop.f32.mrf.mxu0
      %v1018 = vadd.f32 0.0, %v1017
      %1019 = vdwg.mxu0
      %v1020 = vld [vmem:[%s6] sm:$0xff]
      %1022 = vset.pattern.permute.xlu0 0
      %1023 = vperm.xlu0 %1022, %v1020
      %v1024 = vpop.permute.xlu0 %1023
      %v1026 = vadd.f32 %v969, %v1024
      %v1027 = vadd.f32 %v971, %v1024
      %v1028 = vadd.f32 %v1012, %v1024
      %v1029 = vadd.f32 %v1014, %v1024
      %v1030 = vrot.slane %v1026, 4
      %v1031 = vmax.f32 %v1026, %v1030
      %v1032 = vrot.slane %v1031, 2
      %v1033 = vmax.f32 %v1031, %v1032
      %v1034 = vrot.slane %v1033, 1
      %v1035 = vmax.f32 %v1033, %v1034
      %v1036 = vrot.slane %v1027, 4
      %v1037 = vmax.f32 %v1027, %v1036
      %v1038 = vrot.slane %v1037, 2
      %v1039 = vmax.f32 %v1037, %v1038
      %v1040 = vrot.slane %v1039, 1
      %v1041 = vmax.f32 %v1039, %v1040
      %v1042 = vrot.slane %v1028, 4
      %v1043 = vmax.f32 %v1028, %v1042
      %v1044 = vrot.slane %v1043, 2
      %v1045 = vmax.f32 %v1043, %v1044
      %v1046 = vrot.slane %v1045, 1
      %v1047 = vmax.f32 %v1045, %v1046
      %v1048 = vrot.slane %v1029, 4
      %v1049 = vmax.f32 %v1029, %v1048
      %v1050 = vrot.slane %v1049, 2
      %v1051 = vmax.f32 %v1049, %v1050
      %v1052 = vrot.slane %v1051, 1
      %v1053 = vmax.f32 %v1051, %v1052
      %v1054 = vxor.u32 %v1035, 2147483648
      %v1055 = vxor.u32 %v1041, 2147483648
      %v1056 = vxor.u32 %v1047, 2147483648
      %v1057 = vxor.u32 %v1053, 2147483648
      %v1058 = vmul.f32 %v1054, 1.442695
      %v1059 = vpow.pop %v1058
      %v1060 = vmul.f32 %v1055, 1.442695
      %v1061 = vpow.pop %v1060
      %v1062 = vmul.f32 %v1056, 1.442695
      %v1063 = vpow.pop %v1062
      %v1064 = vmul.f32 %v1057, 1.442695
      %v1065 = vpow.pop %v1064
      %v1066 = vadd.f32 %v1059, 1.0
      %v1067 = vadd.f32 %v1061, 1.0
      %v1068 = vadd.f32 %v1063, 1.0
      %v1069 = vadd.f32 %v1065, 1.0
      %v1070 = vrcp.pop %v1066
      %v1071 = vmul.f32 1.0, %v1070
      %v1072 = vrcp.pop %v1067
      %v1073 = vmul.f32 1.0, %v1072
      %v1074 = vrcp.pop %v1068
      %v1075 = vmul.f32 1.0, %v1074
      %v1076 = vrcp.pop %v1069
      %v1077 = vmul.f32 1.0, %v1076
      %v1078 = vmul.f32 %v1071, %v900
      %v1079 = vmul.f32 %v1073, %v901
      %v1080 = vmul.f32 %v1075, %v902
      %v1081 = vmul.f32 %v1077, %v903
      %v1082 = vmul.f32 %v1071, %v904
      %v1083 = vmul.f32 %v1073, %v905
      %v1084 = vmul.f32 %v1075, %v906
      %v1085 = vmul.f32 %v1077, %v907
      %v1086 = vmul.f32 %v1071, %v908
      %v1087 = vmul.f32 %v1073, %v909
      %v1088 = vmul.f32 %v1075, %v910
      %v1089 = vmul.f32 %v1077, %v911
      %v1090 = vmul.f32 %v1071, %v912
      %v1091 = vmul.f32 %v1073, %v913
      %v1092 = vmul.f32 %v1075, %v914
      %v1093 = vmul.f32 %v1077, %v915
      %v1094 = vpack.c.bf16 %v1082, %v1078
      %v1095 = vpack.c.bf16 %v1083, %v1079
      %v1096 = vpack.c.bf16 %v1084, %v1080
      %v1097 = vpack.c.bf16 %v1085, %v1081
      %v1098 = vpack.c.bf16 %v1090, %v1086
      %v1099 = vpack.c.bf16 %v1091, %v1087
      %v1100 = vpack.c.bf16 %v1092, %v1088
      %v1101 = vpack.c.bf16 %v1093, %v1089
      %v1110 = vunpack.c.l.b16 %v1094
      %v1111 = vunpack.c.l.b16 %v1095
      %v1112 = vunpack.c.l.b16 %v1096
      %v1113 = vunpack.c.l.b16 %v1097
      %v1114 = vunpack.c.h.b16 %v1094
      %v1115 = vunpack.c.h.b16 %v1095
      %v1116 = vunpack.c.h.b16 %v1096
      %v1117 = vunpack.c.h.b16 %v1097
      %v1118 = vunpack.c.l.b16 %v1098
      %v1119 = vunpack.c.l.b16 %v1099
      %v1120 = vunpack.c.l.b16 %v1100
      %v1121 = vunpack.c.l.b16 %v1101
      %v1122 = vunpack.c.h.b16 %v1098
      %v1123 = vunpack.c.h.b16 %v1099
      %v1124 = vunpack.c.h.b16 %v1100
      %v1125 = vunpack.c.h.b16 %v1101
      %v1126 = vpack.c.b16 %v1111, %v1110
      %v1127 = vpack.c.b16 %v1113, %v1112
      %v1128 = vpack.c.b16 %v1115, %v1114
      %v1129 = vpack.c.b16 %v1117, %v1116
      %v1130 = vpack.c.b16 %v1119, %v1118
      %v1131 = vpack.c.b16 %v1121, %v1120
      %v1132 = vpack.c.b16 %v1123, %v1122
      %v1133 = vpack.c.b16 %v1125, %v1124
      %1142 = vst [vmem:[%s474] sm:$0xff] %v1126
      %1143 = vst [vmem:[%s474 + $0x8] sm:$0xff] %v1127
      %1144 = vst [vmem:[%s474 + $0x10] sm:$0xff] %v1128
      %1145 = vst [vmem:[%s474 + $0x18] sm:$0xff] %v1129
      %1146 = vst [vmem:[%s474 + $0x20] sm:$0xff] %v1130
      %1147 = vst [vmem:[%s474 + $0x28] sm:$0xff] %v1131
      %1148 = vst [vmem:[%s474 + $0x30] sm:$0xff] %v1132
      %1149 = vst [vmem:[%s474 + $0x38] sm:$0xff] %v1133
      %v1150 = vmul.f32 %v1071, %v973
      %v1151 = vmul.f32 %v1073, %v975
      %v1152 = vmul.f32 %v1075, %v1016
      %v1153 = vmul.f32 %v1077, %v1018
      %v1154 = vld [vmem:[%s7] sm:$0xff]
      %1156 = vset.pattern.permute.xlu0 0
      %1157 = vperm.xlu0 %1156, %v1154
      %v1158 = vpop.permute.xlu0 %1157
      %v1160 = vadd.f32 %v1150, %v1158
      %v1161 = vadd.f32 %v1151, %v1158
      %v1162 = vadd.f32 %v1152, %v1158
      %v1163 = vadd.f32 %v1153, %v1158
      %v1164 = vmax.f32 %v1160, 0.0
      %v1165 = vmax.f32 %v1161, 0.0
      %v1166 = vmax.f32 %v1162, 0.0
      %v1167 = vmax.f32 %v1163, 0.0
      %v1168 = vld [vmem:[%s8] sm:$0xf]
      %v1169 = vld [vmem:[%s8 + $0x4] sm:$0xf]
      %v1170 = vld [vmem:[%s8 + $0x8] sm:$0xf]
      %v1171 = vld [vmem:[%s8 + $0xc] sm:$0xf]
      %v1172 = vpack.c.bf16 %v1164, %v1164
      %v1173 = vpack.c.bf16 %v1165, %v1165
      %v1174 = vpack.c.bf16 %v1166, %v1166
      %v1175 = vpack.c.bf16 %v1167, %v1167
      %v1176 = vld [vmem:[%s9] sm:$0xff]
      %v1177 = vld [vmem:[%s9 + $0x8] sm:$0xff]
      %v1178 = vld [vmem:[%s9 + $0x10] sm:$0xff]
      %v1179 = vld [vmem:[%s9 + $0x18] sm:$0xff]
      %1181 = vset.pattern.permute.xlu0 0
      %1182 = vperm.xlu0 %1181, %v1176
      %v1183 = vpop.permute.xlu0 %1182
      %1186 = vset.pattern.permute.xlu0 0
      %1187 = vperm.xlu0 %1186, %v1177
      %v1188 = vpop.permute.xlu0 %1187
      %1191 = vset.pattern.permute.xlu0 0
      %1192 = vperm.xlu0 %1191, %v1178
      %v1193 = vpop.permute.xlu0 %1192
      %1196 = vset.pattern.permute.xlu0 0
      %1197 = vperm.xlu0 %1196, %v1179
      %v1198 = vpop.permute.xlu0 %1197
      %v1204 = vunpack.c.l.b16 %v1168
      %v1205 = vunpack.c.l.b16 %v1169
      %v1206 = vunpack.c.l.b16 %v1170
      %v1207 = vunpack.c.l.b16 %v1171
      %v1208 = vpack.c.b16 %v1205, %v1204
      %v1209 = vpack.c.b16 %v1207, %v1206
      %vm1210 = vcmask 64512
      %v1212 = vsel %vm1210, %v1208, 0
      %v1215 = vsel %vm1210, %v1209, 0
      %vm1217 = vcmask 1043456
      %v1219 = vsel %vm1217, %v1172, 0
      %v1222 = vsel %vm1217, %v1173, 0
      %v1225 = vsel %vm1217, %v1174, 0
      %v1228 = vsel %vm1217, %v1175, 0
      %1230 = vmatprep.subr.bf16.mxu0 0
      %1231 = vmatpush1.bf16.msra.mxu0 0
      %1232 = vmatprep.subr.bf16.mxu0 0
      %1233 = vmatpush1.bf16.msra.mxu0 0
      %1234 = vmatprep.subr.bf16.mxu0 0
      %1235 = vmatpush1.bf16.msra.mxu0 0
      %1236 = vmatprep.subr.bf16.mxu0 0
      %1237 = vmatpush1.bf16.msra.mxu0 0
      %1238 = vmatprep.subr.bf16.mxu0 0
      %1239 = vmatpush1.bf16.msra.mxu0 0
      %1240 = vmatprep.subr.bf16.mxu0 0
      %1241 = vmatpush1.bf16.msra.mxu0 0
      %1242 = vmatprep.subr.bf16.mxu0 0
      %1243 = vmatpush1.bf16.msra.mxu0 0
      %1244 = vmatprep.subr.bf16.mxu0 %v1222
      %1245 = vmatpush1.bf16.msra.mxu0 %v1219
      %1246 = vmatprep.subr.bf16.mxu0 0
      %1247 = vmatpush2.bf16.msra.mxu0 0
      %1248 = vmatprep.subr.bf16.mxu0 0
      %1249 = vmatpush2.bf16.msra.mxu0 0
      %1250 = vmatprep.subr.bf16.mxu0 0
      %1251 = vmatpush2.bf16.msra.mxu0 0
      %1252 = vmatprep.subr.bf16.mxu0 0
      %1253 = vmatpush2.bf16.msra.mxu0 0
      %1254 = vmatprep.subr.bf16.mxu0 0
      %1255 = vmatpush2.bf16.msra.mxu0 0
      %1256 = vmatprep.subr.bf16.mxu0 0
      %1257 = vmatpush2.bf16.msra.mxu0 0
      %1258 = vmatprep.subr.bf16.mxu0 0
      %1259 = vmatpush2.bf16.msra.mxu0 0
      %1260 = vmatprep.subr.bf16.mxu0 0
      %1261 = vmatpush2.bf16.msra.mxu0 0
      %1262 = vmatprep.mubr.bf16.mxu0 0
      %1263 = vmatmul.mubr.bf16.gmra.mxu0 %v1212
      %v1264 = vpop.f32.mrf.mxu0
      %v1265 = vadd.f32 %v1183, %v1264
      %v1266 = vpop.f32.mrf.mxu0
      %v1267 = vadd.f32 %v1183, %v1266
      %v1268 = vpop.f32.mrf.mxu0
      %v1269 = vadd.f32 %v1188, %v1268
      %v1270 = vpop.f32.mrf.mxu0
      %v1271 = vadd.f32 %v1188, %v1270
      %1272 = vmatprep.mubr.bf16.mxu0 0
      %1273 = vmatmul.mubr.bf16.gmra.mxu0 %v1215
      %v1274 = vpop.f32.mrf.mxu0
      %v1275 = vadd.f32 %v1193, %v1274
      %v1276 = vpop.f32.mrf.mxu0
      %v1277 = vadd.f32 %v1193, %v1276
      %v1278 = vpop.f32.mrf.mxu0
      %v1279 = vadd.f32 %v1198, %v1278
      %v1280 = vpop.f32.mrf.mxu0
      %v1281 = vadd.f32 %v1198, %v1280
      %1282 = vdwg.mxu0
      %1283 = vmatprep.subr.bf16.mxu0 0
      %1284 = vmatpush1.bf16.msra.mxu0 0
      %1285 = vmatprep.subr.bf16.mxu0 0
      %1286 = vmatpush1.bf16.msra.mxu0 0
      %1287 = vmatprep.subr.bf16.mxu0 0
      %1288 = vmatpush1.bf16.msra.mxu0 0
      %1289 = vmatprep.subr.bf16.mxu0 0
      %1290 = vmatpush1.bf16.msra.mxu0 0
      %1291 = vmatprep.subr.bf16.mxu0 0
      %1292 = vmatpush1.bf16.msra.mxu0 0
      %1293 = vmatprep.subr.bf16.mxu0 0
      %1294 = vmatpush1.bf16.msra.mxu0 0
      %1295 = vmatprep.subr.bf16.mxu0 0
      %1296 = vmatpush1.bf16.msra.mxu0 0
      %1297 = vmatprep.subr.bf16.mxu0 %v1228
      %1298 = vmatpush1.bf16.msra.mxu0 %v1225
      %1299 = vmatprep.subr.bf16.mxu0 0
      %1300 = vmatpush2.bf16.msra.mxu0 0
      %1301 = vmatprep.subr.bf16.mxu0 0
      %1302 = vmatpush2.bf16.msra.mxu0 0
      %1303 = vmatprep.subr.bf16.mxu0 0
      %1304 = vmatpush2.bf16.msra.mxu0 0
      %1305 = vmatprep.subr.bf16.mxu0 0
      %1306 = vmatpush2.bf16.msra.mxu0 0
      %1307 = vmatprep.subr.bf16.mxu0 0
      %1308 = vmatpush2.bf16.msra.mxu0 0
      %1309 = vmatprep.subr.bf16.mxu0 0
      %1310 = vmatpush2.bf16.msra.mxu0 0
      %1311 = vmatprep.subr.bf16.mxu0 0
      %1312 = vmatpush2.bf16.msra.mxu0 0
      %1313 = vmatprep.subr.bf16.mxu0 0
      %1314 = vmatpush2.bf16.msra.mxu0 0
      %1315 = vmatprep.mubr.bf16.mxu0 0
      %1316 = vmatmul.mubr.bf16.gmra.mxu0 %v1212
      %v1317 = vpop.f32.mrf.mxu0
      %v1318 = vadd.f32 %v1183, %v1317
      %v1319 = vpop.f32.mrf.mxu0
      %v1320 = vadd.f32 %v1183, %v1319
      %v1321 = vpop.f32.mrf.mxu0
      %v1322 = vadd.f32 %v1188, %v1321
      %v1323 = vpop.f32.mrf.mxu0
      %v1324 = vadd.f32 %v1188, %v1323
      %1325 = vmatprep.mubr.bf16.mxu0 0
      %1326 = vmatmul.mubr.bf16.gmra.mxu0 %v1215
      %v1327 = vpop.f32.mrf.mxu0
      %v1328 = vadd.f32 %v1193, %v1327
      %v1329 = vpop.f32.mrf.mxu0
      %v1330 = vadd.f32 %v1193, %v1329
      %v1331 = vpop.f32.mrf.mxu0
      %v1332 = vadd.f32 %v1198, %v1331
      %v1333 = vpop.f32.mrf.mxu0
      %v1334 = vadd.f32 %v1198, %v1333
      %1335 = vdwg.mxu0
      %v1336 = vmax.f32 %v1265, %v1267
      %v1337 = vmax.f32 %v1336, %v1318
      %v1338 = vmax.f32 %v1337, %v1320
      %1339 = vmax.xlane.f32.xlu0 %v1338
      %v1340 = vpop.xlane.xlu0 %1339
      %v1341 = vmax.f32 %v1269, %v1271
      %v1342 = vmax.f32 %v1341, %v1322
      %v1343 = vmax.f32 %v1342, %v1324
      %1344 = vmax.xlane.f32.xlu0 %v1343
      %v1345 = vpop.xlane.xlu0 %1344
      %v1346 = vmax.f32 %v1275, %v1277
      %v1347 = vmax.f32 %v1346, %v1328
      %v1348 = vmax.f32 %v1347, %v1330
      %1349 = vmax.xlane.f32.xlu0 %v1348
      %v1350 = vpop.xlane.xlu0 %1349
      %v1351 = vmax.f32 %v1279, %v1281
      %v1352 = vmax.f32 %v1351, %v1332
      %v1353 = vmax.f32 %v1352, %v1334
      %1354 = vmax.xlane.f32.xlu0 %v1353
      %v1355 = vpop.xlane.xlu0 %1354
      %vm1356 = vcmask 7168
      %1357 = vst.msk [vmem:[%s484] sm:$0xff] %vm1356, %v1340
      %1358 = vst.msk [vmem:[%s484 + $0x8] sm:$0xff] %vm1356, %v1345
      %1359 = vst.msk [vmem:[%s484 + $0x10] sm:$0xff] %vm1356, %v1350
      %1360 = vst.msk [vmem:[%s484 + $0x18] sm:$0xff] %vm1356, %v1355
      %s1361 = smul.u32 4, %s27
      %p1362 = scmp.lt.s32.totalorder %s28, 1
      %s1363 = scalar_select %p1362, %s28, 1
      %p1364 = scmp.lt.s32.totalorder %s1361, 3
      %s1365 = scalar_select %p1364, %s1361, 3
      %s1366 = smul.addr %s1363, 16
      %s1367 = sadd.s32 %s1365, %s1366
      %s1368 = smul.addr %s1367, 4
      %s1369 = scalar_lea.vmem %s10, %s1368
      %p1370 = scmp.lt.s32.totalorder %s28, 1
      %s1371 = scalar_select %p1370, %s28, 1
      %p1372 = scmp.lt.s32.totalorder %s27, 0
      %s1373 = scalar_select %p1372, %s27, 0
      %s1374 = smul.addr %s1373, 4
      %s1375 = smul.addr %s1371, 4
      %s1376 = sadd.s32 %s1374, %s1375
      %s1377 = smul.addr %s1376, 8
      %s1378 = scalar_lea.vmem %s11, %s1377
      // Predicated region
      $region61: #{pointwise_gate5_forward.1} parent=59 // pred_check
        %p1379 = pneg %p279
      $region62: #{pointwise_gate5_forward.1} parent=59 // pred_check_branch
        %1381 = sbr.rel (%p1379) target = $region64
      $region63: #{pointwise_gate5_forward.1} parent=59 // pred_region
        %s1382 = smul.u32 4, %s27
      $region64: #{pointwise_gate5_forward.1} parent=59 // pred_fallthru
        _
      // Predicated region
      $region65: #{pointwise_gate5_forward.1} parent=59 // pred_check
        %p1383 = pneg %p307
      $region66: #{pointwise_gate5_forward.1} parent=59 // pred_check_branch
        %1385 = sbr.rel (%p1383) target = $region68
      $region67: #{pointwise_gate5_forward.1} parent=59 // pred_region
        _
      $region68: #{pointwise_gate5_forward.1} parent=59 // pred_fallthru
        _
    $region60: #{pointwise_gate5_forward.1} parent=5 // pred_fallthru
      _
    %p1386 = scmp.le.s32.totalorder 2, %s18
    // Predicated region
    $region69: #{pointwise_gate5_forward.1} parent=5 // pred_check
      %p1387 = pneg %p1386
    $region70: #{pointwise_gate5_forward.1} parent=5 // pred_check_branch
      %1389 = sbr.rel (%p1387) target = $region72
    $region71: #{pointwise_gate5_forward.1} parent=5 // pred_region
      %s1390 = ssub.s32 %s18, 2
      // Predicated region
      $region73: #{pointwise_gate5_forward.1} parent=71 // pred_check
        %p1391 = pneg %p285
      $region74: #{pointwise_gate5_forward.1} parent=71 // pred_check_branch
        %1393 = sbr.rel (%p1391) target = $region76
      $region75: #{pointwise_gate5_forward.1} parent=71 // pred_region
        %s1394 = smul.u32 4, %s29
        %p1395 = scmp.lt.s32.totalorder %s30, 1
        %s1396 = scalar_select %p1395, %s30, 1
        %p1397 = scmp.lt.s32.totalorder %s1394, 3
        %s1398 = scalar_select %p1397, %s1394, 3
        %s1399 = smul.addr %s1396, 16
        %s1400 = sadd.s32 %s1398, %s1399
        %s1401 = smul.addr %s1400, 4
        %s1402 = scalar_lea.vmem %s10, %s1401
      $region76: #{pointwise_gate5_forward.1} parent=71 // pred_fallthru
        _
      // Predicated region
      $region77: #{pointwise_gate5_forward.1} parent=71 // pred_check
        %p1403 = pneg %p313
      $region78: #{pointwise_gate5_forward.1} parent=71 // pred_check_branch
        %1405 = sbr.rel (%p1403) target = $region80
      $region79: #{pointwise_gate5_forward.1} parent=71 // pred_region
        %p1406 = scmp.lt.s32.totalorder %s30, 1
        %s1407 = scalar_select %p1406, %s30, 1
        %p1408 = scmp.lt.s32.totalorder %s29, 0
        %s1409 = scalar_select %p1408, %s29, 0
        %s1410 = smul.addr %s1409, 4
        %s1411 = smul.addr %s1407, 4
        %s1412 = sadd.s32 %s1410, %s1411
        %s1413 = smul.addr %s1412, 8
        %s1414 = scalar_lea.vmem %s11, %s1413
      $region80: #{pointwise_gate5_forward.1} parent=71 // pred_fallthru
        _
    $region72: #{pointwise_gate5_forward.1} parent=5 // pred_fallthru
      _
  $region6: #{pointwise_gate5_forward.1} parent=0 // loop_footer
    %s22 = sadd.s32 1, %s18
  $region7: #{pointwise_gate5_forward.1} parent=0 // loop_footer_branch
    %17 = sbr.rel target = $region3
  $region8: #{pointwise_gate5_forward.1} parent=0 // loop_exit
    _

</llo_original>
